<compile_context>
chip_gen: v6e
topology: v6e:2x2x1
jax: 0.10.0
libtpu: 0.0.40
codegen_flags: <defaults>
</compile_context>

<pallas_src>
import functools

import jax
import jax.numpy as jnp
import numpy as np
from jax.experimental import pallas as pl
from jax.experimental.pallas import tpu as pltpu

KERNEL_SIZE = 25
PAD = 12
EXPANSION = 4
HALO = 128          # lane-aligned halo width (multiple of 128, >= PAD)


def _round_up(x, m):
    return ((x + m - 1) // m) * m


def _cdiv(a, b):
    return -(-a // b)


# --------------------------------- kernel -----------------------------------
def _block_kernel(xc_ref, xl_ref, xr_ref, w1_ref, w2_ref, w3_ref,
                  b1_ref, b2_ref, b3_ref, o_ref, *, l_tile, length):
    """One (batch, L-tile) block.

    xc_ref: (1, Cin, Lt)   f32  current tile of x (also the exact residual)
    xl_ref: (1, Cin, 128)  f32  the 128 columns left of the tile   (halo)
    xr_ref: (1, Cin, 128)  f32  the 128 columns right of the tile  (halo)
    w1_ref: (P,  Cin)      bf16 conv1 weight (BN1 scale folded in)
    w2_ref: (P,  25*P)     bf16 conv2 weight (k-major / in-ch minor, BN2 folded)
    w3_ref: (4P, P)        bf16 conv3 weight (BN3 scale folded in)
    b*_ref: (C, 1)         f32  BN shifts
    o_ref : (1, 4P, Lt)
    """
    j = pl.program_id(1)
    base = j * l_tile

    xc = xc_ref[0]                       # (Cin, Lt)  f32
    xl = xl_ref[0]                       # (Cin, 128) f32
    xr = xr_ref[0]                       # (Cin, 128) f32

    w1 = w1_ref[...]
    b1 = b1_ref[...]

    # conv1 (1x1) == channel matmul; bf16 operands, f32 accumulation.
    def conv1_bn_relu(xp):
        z = jnp.dot(w1, xp.astype(jnp.bfloat16),
                    preferred_element_type=jnp.float32)
        return jnp.maximum(z + b1, 0.0)

    hc = conv1_bn_relu(xc)               # (P, Lt)
    hl = conv1_bn_relu(xl)               # (P, 128)
    hr = conv1_bn_relu(xr)               # (P, 128)
    # Dropout(p=0.2) is identity in eval mode.

    # Zero every column outside [0, L) so conv2 sees exactly PyTorch's zero
    # padding (this also kills garbage from clamped / ragged edge blocks),
    # then cast once to bf16 so the im2col buffer is built directly in bf16.
    col_c = jax.lax.broadcasted_iota(jnp.int32, (1, l_tile), 1) + base
    col_l = jax.lax.broadcasted_iota(jnp.int32, (1, HALO), 1) + (base - HALO)
    col_r = jax.lax.broadcasted_iota(jnp.int32, (1, HALO), 1) + (base + l_tile)
    hc = jnp.where(col_c < length, hc, 0.0).astype(jnp.bfloat16)
    hl = jnp.where(col_l >= 0, hl, 0.0).astype(jnp.bfloat16)
    hr = jnp.where(col_r < length, hr, 0.0).astype(jnp.bfloat16)

    # Assembled window (P, 128 + Lt + 128); every piece lands lane-aligned.
    hw = jnp.concatenate([hl, hc, hr], axis=1)

    # conv2 (k=25, pad=12): bf16 im2col -> one K = 25*P MXU contraction.
    off = HALO - PAD
    hcol = jnp.concatenate(
        [hw[:, off + k: off + k + l_tile] for k in range(KERNEL_SIZE)],
        axis=0)                                              # (25P, Lt) bf16
    z2 = jnp.dot(w2_ref[...], hcol, preferred_element_type=jnp.float32)
    h2 = jnp.maximum(z2 + b2_ref[...], 0.0).astype(jnp.bfloat16)   # BN2+ReLU

    # conv3 (1x1) up to expansion*planes channels, + residual (exact f32 xc).
    z3 = jnp.dot(w3_ref[...], h2, preferred_element_type=jnp.float32)
    out = jnp.maximum(z3 + b3_ref[...] + xc, 0.0)                  # BN3+res+ReLU
    o_ref[0] = out.astype(o_ref.dtype)


# ------------------------------ VMEM estimate --------------------------------
def _est_vmem_bytes(cin, planes, l_tile, single_buffer_weights):
    cexp = EXPANSION * planes
    w = l_tile + 2 * HALO
    x_bufs = 2 * cin * l_tile * 4 + 2 * 2 * cin * HALO * 4     # double-buffered
    o_bufs = 2 * cexp * l_tile * 4
    wmult = 1 if single_buffer_weights else 2
    w_bufs = wmult * ((planes * cin + planes * KERNEL_SIZE * planes
                       + cexp * planes) * 2
                      + (planes + planes + cexp) * 128 * 4)
    tmp = (KERNEL_SIZE * planes * l_tile * 2       # bf16 im2col
           + planes * w * 2                        # bf16 assembled window
           + 2 * planes * w * 4                    # f32 conv1/conv2 activations
           + 2 * cexp * l_tile * 4)                # f32 conv3 / output staging
    return int(1.5 * (x_bufs + o_bufs + w_bufs + tmp))


# --------------------------------- wrapper -----------------------------------
def basic_block_bottle(x, params, *, l_tile=None, out_dtype=None):
    """Eval-mode BasicBlock_Bottle.  x: (N, Cin, L) f32, Cin == 4*planes."""
    N, Cin, L = x.shape
    planes = params["w1"].shape[0]
    cexp = EXPANSION * planes
    assert Cin == cexp, "downsample=None requires inplanes == expansion*planes"
    out_dtype = x.dtype if out_dtype is None else out_dtype

    # ---- generation-aware tile sizing ---------------------------------------
    try:
        vmem_cap = int(pltpu.get_tpu_info().vmem_capacity_bytes)
    except Exception:
        vmem_cap = 128 * 1024 * 1024
    if l_tile is None:
        # v5e/v6e (128 MiB VMEM): big tiles; v7x (64 MiB): smaller tiles.
        l_tile = 2048 if vmem_cap >= (100 << 20) else 1024
        l_tile = min(l_tile, _round_up(L, 128))
        # stay well inside VMEM (double buffers + bf16 im2col + temporaries)
        while l_tile > 128 and _est_vmem_bytes(Cin, planes, l_tile, True) > vmem_cap // 3:
            l_tile -= 128
        # keep >= 4 grid points so both TensorCores stay busy on v7x
        while l_tile > 128 and N * _cdiv(L, l_tile) < 4:
            l_tile -= 128
    l_tile = max(128, min(_round_up(l_tile, 128), _round_up(L, 128)))

    T = _cdiv(L, l_tile)
    lt128 = l_tile // 128
    nb128 = _cdiv(L, 128)

    # ---- fold BN (running stats, affine) into weights + per-channel shift ----
    def _fold(gamma, beta, mean, var, eps=1e-5):
        scale = gamma * jax.lax.rsqrt(var + eps)
        return scale, beta - mean * scale

    s1, b1 = _fold(*params["bn1"])
    s2, b2 = _fold(*params["bn2"])
    s3, b3 = _fold(*params["bn3"])

    w1f = (params["w1"] * s1[:, None]).astype(jnp.bfloat16)              # (P, Cin)
    w2f = jnp.transpose(params["w2"] * s2[None, :, None], (1, 0, 2)) \
            .reshape(planes, KERNEL_SIZE * planes).astype(jnp.bfloat16)  # (P, 25P)
    w3f = (params["w3"] * s3[:, None]).astype(jnp.bfloat16)              # (4P, P)
    b1c = b1[:, None].astype(jnp.float32)                                # (P, 1)
    b2c = b2[:, None].astype(jnp.float32)                                # (P, 1)
    b3c = b3[:, None].astype(jnp.float32)                                # (4P, 1)

    kernel = functools.partial(_block_kernel, l_tile=l_tile, length=L)

    flops = 2 * N * T * (
        (l_tile + 2 * HALO) * planes * Cin
        + l_tile * KERNEL_SIZE * planes * planes
        + l_tile * cexp * planes)
    bytes_accessed = (N * Cin * (L + T * 2 * HALO) * 4 + N * cexp * L * 4
                      + (w1f.size + w2f.size + w3f.size) * 2
                      + (b1c.size + b2c.size + b3c.size) * 4)
    vmem_limit = int(min(vmem_cap // 2,
                         max(32 << 20,
                             2 * _est_vmem_bytes(Cin, planes, l_tile, True))))

    def _run(single_buffer_weights):
        def const_spec(a):
            idx = lambda n, j: (0,) * a.ndim
            if single_buffer_weights and hasattr(pl, "Buffered"):
                # constant operands: block index never changes -> single buffer
                return pl.BlockSpec(a.shape, idx, pipeline_mode=pl.Buffered(1))
            return pl.BlockSpec(a.shape, idx)

        grid_spec = pltpu.PrefetchScalarGridSpec(
            num_scalar_prefetch=0,
            grid=(N, T),
            in_specs=[
                # current tile of x (lane-aligned; also the exact residual)
                pl.BlockSpec((1, Cin, l_tile), lambda n, j: (n, 0, j)),
                # 128-wide left halo (block index clamped at the left edge;
                # out-of-range columns are zeroed in-kernel)
                pl.BlockSpec((1, Cin, HALO),
                             lambda n, j: (n, 0, jnp.maximum(j * lt128 - 1, 0))),
                # 128-wide right halo (clamped at the right edge)
                pl.BlockSpec((1, Cin, HALO),
                             lambda n, j: (n, 0, jnp.minimum((j + 1) * lt128,
                                                             nb128 - 1))),
                const_spec(w1f), const_spec(w2f), const_spec(w3f),
                const_spec(b1c), const_spec(b2c), const_spec(b3c),
            ],
            out_specs=pl.BlockSpec((1, cexp, l_tile), lambda n, j: (n, 0, j)),
        )

        return pl.pallas_call(
            kernel,
            out_shape=jax.ShapeDtypeStruct((N, cexp, L), out_dtype),
            grid_spec=grid_spec,
            compiler_params=pltpu.CompilerParams(
                dimension_semantics=("parallel", "parallel"),
                vmem_limit_bytes=vmem_limit),
            cost_estimate=pl.CostEstimate(flops=int(flops), transcendentals=0,
                                          bytes_accessed=int(bytes_accessed)),
        )(x, x, x, w1f, w2f, w3f, b1c, b2c, b3c)

    try:
        return _run(True)
    except Exception:
        # Older Pallas without BlockSpec(pipeline_mode=...): fall back to the
        # default double-buffered weight specs (correctness unchanged).
        return _run(False)


# ------------------------- pure-JAX reference (XLA) -------------------------
def _conv1d(x, w, stride=1, padding=0):
    return jax.lax.conv_general_dilated(
        x, w, window_strides=(stride,), padding=[(padding, padding)],
        dimension_numbers=("NCH", "OIH", "NCH"))


def reference(x, params):
    def bn(h, g, b, m, v, eps=1e-5):
        return (h - m[None, :, None]) / jnp.sqrt(v[None, :, None] + eps) \
            * g[None, :, None] + b[None, :, None]

    w1 = params["w1"][:, :, None]                        # (P, Cin, 1)
    w2 = jnp.transpose(params["w2"], (1, 2, 0))          # (P, P, 25)
    w3 = params["w3"][:, :, None]                        # (4P, P, 1)

    h = jax.nn.relu(bn(_conv1d(x, w1), *params["bn1"]))
    h = jax.nn.relu(bn(_conv1d(h, w2, padding=PAD), *params["bn2"]))
    h = bn(_conv1d(h, w3), *params["bn3"])
    return jax.nn.relu(h + x)


# ---------------------------------- main -------------------------------------
if __name__ == "__main__":
    # Small but representative: 2 L-tiles per batch element (exercises the
    # cross-tile halo) plus a ragged tail (exercises the boundary masking and
    # the clamped halo block indices).
    N, planes, L = 2, 8, 192
    Cin = EXPANSION * planes                              # 32

    key = jax.random.PRNGKey(0)
    keys = jax.random.split(key, 8)

    x = jax.random.normal(keys[0], (N, Cin, L), jnp.float32)

    def make_bn(k, c):
        k1, k2, k3, k4 = jax.random.split(k, 4)
        gamma = jax.random.uniform(k1, (c,), jnp.float32, 0.5, 1.5)
        beta = 0.1 * jax.random.normal(k2, (c,), jnp.float32)
        rmean = 0.1 * jax.random.normal(k3, (c,), jnp.float32)
        rvar = jax.random.uniform(k4, (c,), jnp.float32, 0.5, 1.5)
        return (gamma, beta, rmean, rvar)

    params = {
        "w1": 0.2 * jax.random.normal(keys[1], (planes, Cin), jnp.float32),
        "w2": 0.1 * jax.random.normal(keys[2], (KERNEL_SIZE, planes, planes),
                                      jnp.float32),
        "w3": 0.2 * jax.random.normal(keys[3], (Cin, planes), jnp.float32),
        "bn1": make_bn(keys[4], planes),
        "bn2": make_bn(keys[5], planes),
        "bn3": make_bn(keys[6], Cin),
    }

    out = jax.block_until_ready(basic_block_bottle(x, params, l_tile=128))
    ref = jax.block_until_ready(reference(x, params))

    # bf16 matmul operands (f32 accumulate) => small numeric deviation budget.
    np.testing.assert_allclose(np.asarray(out), np.asarray(ref),
                               rtol=3e-2, atol=3e-2)
    print("KERNEL_OK")
</pallas_src>

<mosaic_0001>
module attributes {stable_mosaic.version = 11 : i64} {
  func.func @_block_kernel(%arg0: i32, %arg1: i32, %arg2: memref<1x32x128xf32, #tpu.memory_space<vmem>>, %arg3: memref<1x32x128xf32, #tpu.memory_space<vmem>>, %arg4: memref<1x32x128xf32, #tpu.memory_space<vmem>>, %arg5: memref<8x32xbf16, #tpu.memory_space<vmem>>, %arg6: memref<8x200xbf16, #tpu.memory_space<vmem>>, %arg7: memref<32x8xbf16, #tpu.memory_space<vmem>>, %arg8: memref<8x1xf32, #tpu.memory_space<vmem>>, %arg9: memref<8x1xf32, #tpu.memory_space<vmem>>, %arg10: memref<32x1xf32, #tpu.memory_space<vmem>>, %arg11: memref<1x32x128xf32, #tpu.memory_space<vmem>>) attributes {dimension_semantics = [#tpu.dimension_semantics<parallel>, #tpu.dimension_semantics<parallel>], iteration_bounds = array<i64: 2, 2>, scalar_prefetch = 0 : i64, scratch_operands = 0 : i64, tpu.core_type = #tpu.core_type<tc>, window_params = [{transform_indices = @transform_0, window_bounds = array<i64: 1, 32, 128>}, {transform_indices = @transform_1, window_bounds = array<i64: 1, 32, 128>}, {transform_indices = @transform_2, window_bounds = array<i64: 1, 32, 128>}, {pipeline_mode = #tpu.pipeline_mode<synchronous>, transform_indices = @transform_3, window_bounds = array<i64: 8, 32>}, {pipeline_mode = #tpu.pipeline_mode<synchronous>, transform_indices = @transform_4, window_bounds = array<i64: 8, 200>}, {pipeline_mode = #tpu.pipeline_mode<synchronous>, transform_indices = @transform_5, window_bounds = array<i64: 32, 8>}, {pipeline_mode = #tpu.pipeline_mode<synchronous>, transform_indices = @transform_6, window_bounds = array<i64: 8, 1>}, {pipeline_mode = #tpu.pipeline_mode<synchronous>, transform_indices = @transform_7, window_bounds = array<i64: 8, 1>}, {pipeline_mode = #tpu.pipeline_mode<synchronous>, transform_indices = @transform_8, window_bounds = array<i64: 32, 1>}, {transform_indices = @transform_9, window_bounds = array<i64: 1, 32, 128>}]} {
    %c128_i32 = arith.constant 128 : i32
    %0 = arith.muli %arg1, %c128_i32 : i32
    %c0 = arith.constant 0 : index
    %c0_0 = arith.constant 0 : index
    %c0_1 = arith.constant 0 : index
    %1 = vector.load %arg2[%c0, %c0_0, %c0_1] : memref<1x32x128xf32, #tpu.memory_space<vmem>>, vector<1x32x128xf32>
    %2 = vector.shape_cast %1 : vector<1x32x128xf32> to vector<32x128xf32>
    %c0_2 = arith.constant 0 : index
    %c0_3 = arith.constant 0 : index
    %c0_4 = arith.constant 0 : index
    %3 = vector.load %arg3[%c0_2, %c0_3, %c0_4] : memref<1x32x128xf32, #tpu.memory_space<vmem>>, vector<1x32x128xf32>
    %4 = vector.shape_cast %3 : vector<1x32x128xf32> to vector<32x128xf32>
    %c0_5 = arith.constant 0 : index
    %c0_6 = arith.constant 0 : index
    %c0_7 = arith.constant 0 : index
    %5 = vector.load %arg4[%c0_5, %c0_6, %c0_7] : memref<1x32x128xf32, #tpu.memory_space<vmem>>, vector<1x32x128xf32>
    %6 = vector.shape_cast %5 : vector<1x32x128xf32> to vector<32x128xf32>
    %c0_8 = arith.constant 0 : index
    %c0_9 = arith.constant 0 : index
    %7 = vector.load %arg5[%c0_8, %c0_9] : memref<8x32xbf16, #tpu.memory_space<vmem>>, vector<8x32xbf16>
    %c0_10 = arith.constant 0 : index
    %c0_11 = arith.constant 0 : index
    %8 = vector.load %arg8[%c0_10, %c0_11] : memref<8x1xf32, #tpu.memory_space<vmem>>, vector<8x1xf32>
    %9 = arith.truncf %2 : vector<32x128xf32> to vector<32x128xbf16>
    %cst = arith.constant dense<0.000000e+00> : vector<8x128xf32>
    %10 = tpu.matmul %7, %9, %cst {dimension_numbers = #tpu.dot_dimension_numbers<[1], [0], [0], [1], [0, 0, 1, 1], [], []>} : vector<8x32xbf16>, vector<32x128xbf16>, vector<8x128xf32> -> vector<8x128xf32>
    %11 = vector.broadcast %8 : vector<8x1xf32> to vector<8x128xf32>
    %12 = arith.addf %10, %11 : vector<8x128xf32>
    %cst_12 = arith.constant 0.000000e+00 : f32
    %13 = vector.broadcast %cst_12 : f32 to vector<8x128xf32>
    %14 = arith.maximumf %12, %13 : vector<8x128xf32>
    %15 = arith.truncf %4 : vector<32x128xf32> to vector<32x128xbf16>
    %cst_13 = arith.constant dense<0.000000e+00> : vector<8x128xf32>
    %16 = tpu.matmul %7, %15, %cst_13 {dimension_numbers = #tpu.dot_dimension_numbers<[1], [0], [0], [1], [0, 0, 1, 1], [], []>} : vector<8x32xbf16>, vector<32x128xbf16>, vector<8x128xf32> -> vector<8x128xf32>
    %17 = vector.broadcast %8 : vector<8x1xf32> to vector<8x128xf32>
    %18 = arith.addf %16, %17 : vector<8x128xf32>
    %cst_14 = arith.constant 0.000000e+00 : f32
    %19 = vector.broadcast %cst_14 : f32 to vector<8x128xf32>
    %20 = arith.maximumf %18, %19 : vector<8x128xf32>
    %21 = arith.truncf %6 : vector<32x128xf32> to vector<32x128xbf16>
    %cst_15 = arith.constant dense<0.000000e+00> : vector<8x128xf32>
    %22 = tpu.matmul %7, %21, %cst_15 {dimension_numbers = #tpu.dot_dimension_numbers<[1], [0], [0], [1], [0, 0, 1, 1], [], []>} : vector<8x32xbf16>, vector<32x128xbf16>, vector<8x128xf32> -> vector<8x128xf32>
    %23 = vector.broadcast %8 : vector<8x1xf32> to vector<8x128xf32>
    %24 = arith.addf %22, %23 : vector<8x128xf32>
    %cst_16 = arith.constant 0.000000e+00 : f32
    %25 = vector.broadcast %cst_16 : f32 to vector<8x128xf32>
    %26 = arith.maximumf %24, %25 : vector<8x128xf32>
    %27 = tpu.iota {dimensions = array<i32: 1>} : vector<1x128xi32>
    %28 = vector.broadcast %0 : i32 to vector<1x128xi32>
    %29 = arith.addi %27, %28 : vector<1x128xi32>
    %30 = tpu.iota {dimensions = array<i32: 1>} : vector<1x128xi32>
    %c128_i32_17 = arith.constant 128 : i32
    %31 = arith.subi %0, %c128_i32_17 : i32
    %32 = vector.broadcast %31 : i32 to vector<1x128xi32>
    %33 = arith.addi %30, %32 : vector<1x128xi32>
    %34 = tpu.iota {dimensions = array<i32: 1>} : vector<1x128xi32>
    %c128_i32_18 = arith.constant 128 : i32
    %35 = arith.addi %0, %c128_i32_18 : i32
    %36 = vector.broadcast %35 : i32 to vector<1x128xi32>
    %37 = arith.addi %34, %36 : vector<1x128xi32>
    %c192_i32 = arith.constant 192 : i32
    %38 = vector.broadcast %c192_i32 : i32 to vector<1x128xi32>
    %39 = arith.cmpi slt, %29, %38 : vector<1x128xi32>
    %cst_19 = arith.constant 0.000000e+00 : f32
    %40 = vector.shape_cast %39 : vector<1x128xi1> to vector<1x128xi1>
    %41 = vector.broadcast %40 : vector<1x128xi1> to vector<8x128xi1>
    %42 = vector.broadcast %cst_19 : f32 to vector<8x128xf32>
    %43 = arith.select %41, %14, %42 : vector<8x128xi1>, vector<8x128xf32>
    %44 = arith.truncf %43 : vector<8x128xf32> to vector<8x128xbf16>
    %c0_i32 = arith.constant 0 : i32
    %45 = vector.broadcast %c0_i32 : i32 to vector<1x128xi32>
    %46 = arith.cmpi sge, %33, %45 : vector<1x128xi32>
    %cst_20 = arith.constant 0.000000e+00 : f32
    %47 = vector.shape_cast %46 : vector<1x128xi1> to vector<1x128xi1>
    %48 = vector.broadcast %47 : vector<1x128xi1> to vector<8x128xi1>
    %49 = vector.broadcast %cst_20 : f32 to vector<8x128xf32>
    %50 = arith.select %48, %20, %49 : vector<8x128xi1>, vector<8x128xf32>
    %51 = arith.truncf %50 : vector<8x128xf32> to vector<8x128xbf16>
    %c192_i32_21 = arith.constant 192 : i32
    %52 = vector.broadcast %c192_i32_21 : i32 to vector<1x128xi32>
    %53 = arith.cmpi slt, %37, %52 : vector<1x128xi32>
    %cst_22 = arith.constant 0.000000e+00 : f32
    %54 = vector.shape_cast %53 : vector<1x128xi1> to vector<1x128xi1>
    %55 = vector.broadcast %54 : vector<1x128xi1> to vector<8x128xi1>
    %56 = vector.broadcast %cst_22 : f32 to vector<8x128xf32>
    %57 = arith.select %55, %26, %56 : vector<8x128xi1>, vector<8x128xf32>
    %58 = arith.truncf %57 : vector<8x128xf32> to vector<8x128xbf16>
    %59 = tpu.concatenate %51, %44, %58 in 1 : vector<8x128xbf16>, vector<8x128xbf16>, vector<8x128xbf16> -> vector<8x384xbf16>
    %60 = vector.extract_strided_slice %59 {offsets = [0, 116], sizes = [8, 128], strides = [1, 1]} : vector<8x384xbf16> to vector<8x128xbf16>
    %61 = vector.extract_strided_slice %59 {offsets = [0, 117], sizes = [8, 128], strides = [1, 1]} : vector<8x384xbf16> to vector<8x128xbf16>
    %62 = vector.extract_strided_slice %59 {offsets = [0, 118], sizes = [8, 128], strides = [1, 1]} : vector<8x384xbf16> to vector<8x128xbf16>
    %63 = vector.extract_strided_slice %59 {offsets = [0, 119], sizes = [8, 128], strides = [1, 1]} : vector<8x384xbf16> to vector<8x128xbf16>
    %64 = vector.extract_strided_slice %59 {offsets = [0, 120], sizes = [8, 128], strides = [1, 1]} : vector<8x384xbf16> to vector<8x128xbf16>
    %65 = vector.extract_strided_slice %59 {offsets = [0, 121], sizes = [8, 128], strides = [1, 1]} : vector<8x384xbf16> to vector<8x128xbf16>
    %66 = vector.extract_strided_slice %59 {offsets = [0, 122], sizes = [8, 128], strides = [1, 1]} : vector<8x384xbf16> to vector<8x128xbf16>
    %67 = vector.extract_strided_slice %59 {offsets = [0, 123], sizes = [8, 128], strides = [1, 1]} : vector<8x384xbf16> to vector<8x128xbf16>
    %68 = vector.extract_strided_slice %59 {offsets = [0, 124], sizes = [8, 128], strides = [1, 1]} : vector<8x384xbf16> to vector<8x128xbf16>
    %69 = vector.extract_strided_slice %59 {offsets = [0, 125], sizes = [8, 128], strides = [1, 1]} : vector<8x384xbf16> to vector<8x128xbf16>
    %70 = vector.extract_strided_slice %59 {offsets = [0, 126], sizes = [8, 128], strides = [1, 1]} : vector<8x384xbf16> to vector<8x128xbf16>
    %71 = vector.extract_strided_slice %59 {offsets = [0, 127], sizes = [8, 128], strides = [1, 1]} : vector<8x384xbf16> to vector<8x128xbf16>
    %72 = vector.extract_strided_slice %59 {offsets = [0, 128], sizes = [8, 128], strides = [1, 1]} : vector<8x384xbf16> to vector<8x128xbf16>
    %73 = vector.extract_strided_slice %59 {offsets = [0, 129], sizes = [8, 128], strides = [1, 1]} : vector<8x384xbf16> to vector<8x128xbf16>
    %74 = vector.extract_strided_slice %59 {offsets = [0, 130], sizes = [8, 128], strides = [1, 1]} : vector<8x384xbf16> to vector<8x128xbf16>
    %75 = vector.extract_strided_slice %59 {offsets = [0, 131], sizes = [8, 128], strides = [1, 1]} : vector<8x384xbf16> to vector<8x128xbf16>
    %76 = vector.extract_strided_slice %59 {offsets = [0, 132], sizes = [8, 128], strides = [1, 1]} : vector<8x384xbf16> to vector<8x128xbf16>
    %77 = vector.extract_strided_slice %59 {offsets = [0, 133], sizes = [8, 128], strides = [1, 1]} : vector<8x384xbf16> to vector<8x128xbf16>
    %78 = vector.extract_strided_slice %59 {offsets = [0, 134], sizes = [8, 128], strides = [1, 1]} : vector<8x384xbf16> to vector<8x128xbf16>
    %79 = vector.extract_strided_slice %59 {offsets = [0, 135], sizes = [8, 128], strides = [1, 1]} : vector<8x384xbf16> to vector<8x128xbf16>
    %80 = vector.extract_strided_slice %59 {offsets = [0, 136], sizes = [8, 128], strides = [1, 1]} : vector<8x384xbf16> to vector<8x128xbf16>
    %81 = vector.extract_strided_slice %59 {offsets = [0, 137], sizes = [8, 128], strides = [1, 1]} : vector<8x384xbf16> to vector<8x128xbf16>
    %82 = vector.extract_strided_slice %59 {offsets = [0, 138], sizes = [8, 128], strides = [1, 1]} : vector<8x384xbf16> to vector<8x128xbf16>
    %83 = vector.extract_strided_slice %59 {offsets = [0, 139], sizes = [8, 128], strides = [1, 1]} : vector<8x384xbf16> to vector<8x128xbf16>
    %84 = vector.extract_strided_slice %59 {offsets = [0, 140], sizes = [8, 128], strides = [1, 1]} : vector<8x384xbf16> to vector<8x128xbf16>
    %85 = tpu.concatenate %60, %61, %62, %63, %64, %65, %66, %67, %68, %69, %70, %71, %72, %73, %74, %75 in 0 : vector<8x128xbf16>, vector<8x128xbf16>, vector<8x128xbf16>, vector<8x128xbf16>, vector<8x128xbf16>, vector<8x128xbf16>, vector<8x128xbf16>, vector<8x128xbf16>, vector<8x128xbf16>, vector<8x128xbf16>, vector<8x128xbf16>, vector<8x128xbf16>, vector<8x128xbf16>, vector<8x128xbf16>, vector<8x128xbf16>, vector<8x128xbf16> -> vector<128x128xbf16>
    %86 = tpu.concatenate %76, %77, %78, %79, %80, %81, %82, %83, %84 in 0 : vector<8x128xbf16>, vector<8x128xbf16>, vector<8x128xbf16>, vector<8x128xbf16>, vector<8x128xbf16>, vector<8x128xbf16>, vector<8x128xbf16>, vector<8x128xbf16>, vector<8x128xbf16> -> vector<72x128xbf16>
    %87 = tpu.concatenate %85, %86 in 0 : vector<128x128xbf16>, vector<72x128xbf16> -> vector<200x128xbf16>
    %c0_23 = arith.constant 0 : index
    %c0_24 = arith.constant 0 : index
    %88 = vector.load %arg6[%c0_23, %c0_24] : memref<8x200xbf16, #tpu.memory_space<vmem>>, vector<8x200xbf16>
    %cst_25 = arith.constant dense<0.000000e+00> : vector<8x128xf32>
    %89 = tpu.matmul %88, %87, %cst_25 {dimension_numbers = #tpu.dot_dimension_numbers<[1], [0], [0], [1], [0, 0, 1, 1], [], []>} : vector<8x200xbf16>, vector<200x128xbf16>, vector<8x128xf32> -> vector<8x128xf32>
    %c0_26 = arith.constant 0 : index
    %c0_27 = arith.constant 0 : index
    %90 = vector.load %arg9[%c0_26, %c0_27] : memref<8x1xf32, #tpu.memory_space<vmem>>, vector<8x1xf32>
    %91 = vector.broadcast %90 : vector<8x1xf32> to vector<8x128xf32>
    %92 = arith.addf %89, %91 : vector<8x128xf32>
    %cst_28 = arith.constant 0.000000e+00 : f32
    %93 = vector.broadcast %cst_28 : f32 to vector<8x128xf32>
    %94 = arith.maximumf %92, %93 : vector<8x128xf32>
    %95 = arith.truncf %94 : vector<8x128xf32> to vector<8x128xbf16>
    %c0_29 = arith.constant 0 : index
    %c0_30 = arith.constant 0 : index
    %96 = vector.load %arg7[%c0_29, %c0_30] : memref<32x8xbf16, #tpu.memory_space<vmem>>, vector<32x8xbf16>
    %cst_31 = arith.constant dense<0.000000e+00> : vector<32x128xf32>
    %97 = tpu.matmul %96, %95, %cst_31 {dimension_numbers = #tpu.dot_dimension_numbers<[1], [0], [0], [1], [0, 0, 1, 1], [], []>} : vector<32x8xbf16>, vector<8x128xbf16>, vector<32x128xf32> -> vector<32x128xf32>
    %c0_32 = arith.constant 0 : index
    %c0_33 = arith.constant 0 : index
    %98 = vector.load %arg10[%c0_32, %c0_33] : memref<32x1xf32, #tpu.memory_space<vmem>>, vector<32x1xf32>
    %99 = vector.broadcast %98 : vector<32x1xf32> to vector<32x128xf32>
    %100 = arith.addf %97, %99 : vector<32x128xf32>
    %101 = arith.addf %100, %2 : vector<32x128xf32>
    %cst_34 = arith.constant 0.000000e+00 : f32
    %102 = vector.broadcast %cst_34 : f32 to vector<32x128xf32>
    %103 = arith.maximumf %101, %102 : vector<32x128xf32>
    %c0_35 = arith.constant 0 : index
    %c0_36 = arith.constant 0 : index
    %c0_37 = arith.constant 0 : index
    %104 = vector.load %arg11[%c0_35, %c0_36, %c0_37] : memref<1x32x128xf32, #tpu.memory_space<vmem>>, vector<1x32x128xf32>
    %105 = vector.shape_cast %104 : vector<1x32x128xf32> to vector<32x128xf32>
    %106 = vector.shape_cast %103 : vector<32x128xf32> to vector<1x32x128xf32>
    tpu.vector_store %arg11[%c0_35, %c0_36, %c0_37], %106 {strides = array<i32>} : memref<1x32x128xf32, #tpu.memory_space<vmem>>, vector<1x32x128xf32>,
    return
  }
  func.func @transform_0(%arg0: i32, %arg1: i32) -> (i32, i32, i32) {
    %c0_i32 = arith.constant 0 : i32
    %c0_i32_0 = arith.constant 0 : i32
    return %arg0, %c0_i32, %arg1 : i32, i32, i32
  }
  func.func @transform_1(%arg0: i32, %arg1: i32) -> (i32, i32, i32) {
    %c1_i32 = arith.constant 1 : i32
    %0 = arith.muli %arg1, %c1_i32 : i32
    %c1_i32_0 = arith.constant 1 : i32
    %1 = arith.subi %0, %c1_i32_0 : i32
    %c0_i32 = arith.constant 0 : i32
    %2 = arith.maxsi %1, %c0_i32 : i32
    %c0_i32_1 = arith.constant 0 : i32
    %c0_i32_2 = arith.constant 0 : i32
    return %arg0, %c0_i32_1, %2 : i32, i32, i32
  }
  func.func @transform_2(%arg0: i32, %arg1: i32) -> (i32, i32, i32) {
    %c1_i32 = arith.constant 1 : i32
    %0 = arith.addi %arg1, %c1_i32 : i32
    %c1_i32_0 = arith.constant 1 : i32
    %1 = arith.muli %0, %c1_i32_0 : i32
    %c1_i32_1 = arith.constant 1 : i32
    %2 = arith.minsi %1, %c1_i32_1 : i32
    %c0_i32 = arith.constant 0 : i32
    %c0_i32_2 = arith.constant 0 : i32
    return %arg0, %c0_i32, %2 : i32, i32, i32
  }
  func.func @transform_3(%arg0: i32, %arg1: i32) -> (i32, i32) {
    %c0_i32 = arith.constant 0 : i32
    %c0_i32_0 = arith.constant 0 : i32
    %c0_i32_1 = arith.constant 0 : i32
    return %c0_i32, %c0_i32_0 : i32, i32
  }
  func.func @transform_4(%arg0: i32, %arg1: i32) -> (i32, i32) {
    %c0_i32 = arith.constant 0 : i32
    %c0_i32_0 = arith.constant 0 : i32
    %c0_i32_1 = arith.constant 0 : i32
    return %c0_i32, %c0_i32_0 : i32, i32
  }
  func.func @transform_5(%arg0: i32, %arg1: i32) -> (i32, i32) {
    %c0_i32 = arith.constant 0 : i32
    %c0_i32_0 = arith.constant 0 : i32
    %c0_i32_1 = arith.constant 0 : i32
    return %c0_i32, %c0_i32_0 : i32, i32
  }
  func.func @transform_6(%arg0: i32, %arg1: i32) -> (i32, i32) {
    %c0_i32 = arith.constant 0 : i32
    %c0_i32_0 = arith.constant 0 : i32
    %c0_i32_1 = arith.constant 0 : i32
    return %c0_i32, %c0_i32_0 : i32, i32
  }
  func.func @transform_7(%arg0: i32, %arg1: i32) -> (i32, i32) {
    %c0_i32 = arith.constant 0 : i32
    %c0_i32_0 = arith.constant 0 : i32
    %c0_i32_1 = arith.constant 0 : i32
    return %c0_i32, %c0_i32_0 : i32, i32
  }
  func.func @transform_8(%arg0: i32, %arg1: i32) -> (i32, i32) {
    %c0_i32 = arith.constant 0 : i32
    %c0_i32_0 = arith.constant 0 : i32
    %c0_i32_1 = arith.constant 0 : i32
    return %c0_i32, %c0_i32_0 : i32, i32
  }
  func.func @transform_9(%arg0: i32, %arg1: i32) -> (i32, i32, i32) {
    %c0_i32 = arith.constant 0 : i32
    %c0_i32_0 = arith.constant 0 : i32
    return %arg0, %c0_i32, %arg1 : i32, i32, i32
  }
}

module attributes {stable_mosaic.version = 11 : i64} {
  func.func @_block_kernel(%arg0: i32, %arg1: i32, %arg2: memref<1x32x128xf32, #tpu.memory_space<vmem>>, %arg3: memref<1x32x128xf32, #tpu.memory_space<vmem>>, %arg4: memref<1x32x128xf32, #tpu.memory_space<vmem>>, %arg5: memref<8x32xbf16, #tpu.memory_space<vmem>>, %arg6: memref<8x200xbf16, #tpu.memory_space<vmem>>, %arg7: memref<32x8xbf16, #tpu.memory_space<vmem>>, %arg8: memref<8x1xf32, #tpu.memory_space<vmem>>, %arg9: memref<8x1xf32, #tpu.memory_space<vmem>>, %arg10: memref<32x1xf32, #tpu.memory_space<vmem>>, %arg11: memref<1x32x128xf32, #tpu.memory_space<vmem>>) attributes {dimension_semantics = [#tpu.dimension_semantics<parallel>, #tpu.dimension_semantics<parallel>], iteration_bounds = array<i64: 2, 2>, scalar_prefetch = 0 : i64, scratch_operands = 0 : i64, tpu.core_type = #tpu.core_type<tc>, window_params = [{transform_indices = @transform_0, window_bounds = array<i64: 1, 32, 128>}, {transform_indices = @transform_1, window_bounds = array<i64: 1, 32, 128>}, {transform_indices = @transform_2, window_bounds = array<i64: 1, 32, 128>}, {pipeline_mode = #tpu.pipeline_mode<synchronous>, transform_indices = @transform_3, window_bounds = array<i64: 8, 32>}, {pipeline_mode = #tpu.pipeline_mode<synchronous>, transform_indices = @transform_4, window_bounds = array<i64: 8, 200>}, {pipeline_mode = #tpu.pipeline_mode<synchronous>, transform_indices = @transform_5, window_bounds = array<i64: 32, 8>}, {pipeline_mode = #tpu.pipeline_mode<synchronous>, transform_indices = @transform_6, window_bounds = array<i64: 8, 1>}, {pipeline_mode = #tpu.pipeline_mode<synchronous>, transform_indices = @transform_7, window_bounds = array<i64: 8, 1>}, {pipeline_mode = #tpu.pipeline_mode<synchronous>, transform_indices = @transform_8, window_bounds = array<i64: 32, 1>}, {transform_indices = @transform_9, window_bounds = array<i64: 1, 32, 128>}]} {
    %c128_i32 = arith.constant 128 : i32
    %0 = arith.muli %arg1, %c128_i32 : i32
    %c0 = arith.constant 0 : index
    %c0_0 = arith.constant 0 : index
    %c0_1 = arith.constant 0 : index
    %1 = vector.load %arg2[%c0, %c0_0, %c0_1] : memref<1x32x128xf32, #tpu.memory_space<vmem>>, vector<1x32x128xf32>
    %2 = vector.shape_cast %1 : vector<1x32x128xf32> to vector<32x128xf32>
    %c0_2 = arith.constant 0 : index
    %c0_3 = arith.constant 0 : index
    %c0_4 = arith.constant 0 : index
    %3 = vector.load %arg3[%c0_2, %c0_3, %c0_4] : memref<1x32x128xf32, #tpu.memory_space<vmem>>, vector<1x32x128xf32>
    %4 = vector.shape_cast %3 : vector<1x32x128xf32> to vector<32x128xf32>
    %c0_5 = arith.constant 0 : index
    %c0_6 = arith.constant 0 : index
    %c0_7 = arith.constant 0 : index
    %5 = vector.load %arg4[%c0_5, %c0_6, %c0_7] : memref<1x32x128xf32, #tpu.memory_space<vmem>>, vector<1x32x128xf32>
    %6 = vector.shape_cast %5 : vector<1x32x128xf32> to vector<32x128xf32>
    %c0_8 = arith.constant 0 : index
    %c0_9 = arith.constant 0 : index
    %7 = vector.load %arg5[%c0_8, %c0_9] : memref<8x32xbf16, #tpu.memory_space<vmem>>, vector<8x32xbf16>
    %c0_10 = arith.constant 0 : index
    %c0_11 = arith.constant 0 : index
    %8 = vector.load %arg8[%c0_10, %c0_11] : memref<8x1xf32, #tpu.memory_space<vmem>>, vector<8x1xf32>
    %9 = arith.truncf %2 : vector<32x128xf32> to vector<32x128xbf16>
    %cst = arith.constant dense<0.000000e+00> : vector<8x128xf32>
    %10 = tpu.matmul %7, %9, %cst {dimension_numbers = #tpu.dot_dimension_numbers<[1], [0], [0], [1], [0, 0, 1, 1], [], []>} : vector<8x32xbf16>, vector<32x128xbf16>, vector<8x128xf32> -> vector<8x128xf32>
    %11 = vector.broadcast %8 : vector<8x1xf32> to vector<8x128xf32>
    %12 = arith.addf %10, %11 : vector<8x128xf32>
    %cst_12 = arith.constant 0.000000e+00 : f32
    %13 = vector.broadcast %cst_12 : f32 to vector<8x128xf32>
    %14 = arith.maximumf %12, %13 : vector<8x128xf32>
    %15 = arith.truncf %4 : vector<32x128xf32> to vector<32x128xbf16>
    %cst_13 = arith.constant dense<0.000000e+00> : vector<8x128xf32>
    %16 = tpu.matmul %7, %15, %cst_13 {dimension_numbers = #tpu.dot_dimension_numbers<[1], [0], [0], [1], [0, 0, 1, 1], [], []>} : vector<8x32xbf16>, vector<32x128xbf16>, vector<8x128xf32> -> vector<8x128xf32>
    %17 = vector.broadcast %8 : vector<8x1xf32> to vector<8x128xf32>
    %18 = arith.addf %16, %17 : vector<8x128xf32>
    %cst_14 = arith.constant 0.000000e+00 : f32
    %19 = vector.broadcast %cst_14 : f32 to vector<8x128xf32>
    %20 = arith.maximumf %18, %19 : vector<8x128xf32>
    %21 = arith.truncf %6 : vector<32x128xf32> to vector<32x128xbf16>
    %cst_15 = arith.constant dense<0.000000e+00> : vector<8x128xf32>
    %22 = tpu.matmul %7, %21, %cst_15 {dimension_numbers = #tpu.dot_dimension_numbers<[1], [0], [0], [1], [0, 0, 1, 1], [], []>} : vector<8x32xbf16>, vector<32x128xbf16>, vector<8x128xf32> -> vector<8x128xf32>
    %23 = vector.broadcast %8 : vector<8x1xf32> to vector<8x128xf32>
    %24 = arith.addf %22, %23 : vector<8x128xf32>
    %cst_16 = arith.constant 0.000000e+00 : f32
    %25 = vector.broadcast %cst_16 : f32 to vector<8x128xf32>
    %26 = arith.maximumf %24, %25 : vector<8x128xf32>
    %27 = tpu.iota {dimensions = array<i32: 1>} : vector<1x128xi32>
    %28 = vector.broadcast %0 : i32 to vector<1x128xi32>
    %29 = arith.addi %27, %28 : vector<1x128xi32>
    %30 = tpu.iota {dimensions = array<i32: 1>} : vector<1x128xi32>
    %c128_i32_17 = arith.constant 128 : i32
    %31 = arith.subi %0, %c128_i32_17 : i32
    %32 = vector.broadcast %31 : i32 to vector<1x128xi32>
    %33 = arith.addi %30, %32 : vector<1x128xi32>
    %34 = tpu.iota {dimensions = array<i32: 1>} : vector<1x128xi32>
    %c128_i32_18 = arith.constant 128 : i32
    %35 = arith.addi %0, %c128_i32_18 : i32
    %36 = vector.broadcast %35 : i32 to vector<1x128xi32>
    %37 = arith.addi %34, %36 : vector<1x128xi32>
    %c192_i32 = arith.constant 192 : i32
    %38 = vector.broadcast %c192_i32 : i32 to vector<1x128xi32>
    %39 = arith.cmpi slt, %29, %38 : vector<1x128xi32>
    %cst_19 = arith.constant 0.000000e+00 : f32
    %40 = vector.shape_cast %39 : vector<1x128xi1> to vector<1x128xi1>
    %41 = vector.broadcast %40 : vector<1x128xi1> to vector<8x128xi1>
    %42 = vector.broadcast %cst_19 : f32 to vector<8x128xf32>
    %43 = arith.select %41, %14, %42 : vector<8x128xi1>, vector<8x128xf32>
    %44 = arith.truncf %43 : vector<8x128xf32> to vector<8x128xbf16>
    %c0_i32 = arith.constant 0 : i32
    %45 = vector.broadcast %c0_i32 : i32 to vector<1x128xi32>
    %46 = arith.cmpi sge, %33, %45 : vector<1x128xi32>
    %cst_20 = arith.constant 0.000000e+00 : f32
    %47 = vector.shape_cast %46 : vector<1x128xi1> to vector<1x128xi1>
    %48 = vector.broadcast %47 : vector<1x128xi1> to vector<8x128xi1>
    %49 = vector.broadcast %cst_20 : f32 to vector<8x128xf32>
    %50 = arith.select %48, %20, %49 : vector<8x128xi1>, vector<8x128xf32>
    %51 = arith.truncf %50 : vector<8x128xf32> to vector<8x128xbf16>
    %c192_i32_21 = arith.constant 192 : i32
    %52 = vector.broadcast %c192_i32_21 : i32 to vector<1x128xi32>
    %53 = arith.cmpi slt, %37, %52 : vector<1x128xi32>
    %cst_22 = arith.constant 0.000000e+00 : f32
    %54 = vector.shape_cast %53 : vector<1x128xi1> to vector<1x128xi1>
    %55 = vector.broadcast %54 : vector<1x128xi1> to vector<8x128xi1>
    %56 = vector.broadcast %cst_22 : f32 to vector<8x128xf32>
    %57 = arith.select %55, %26, %56 : vector<8x128xi1>, vector<8x128xf32>
    %58 = arith.truncf %57 : vector<8x128xf32> to vector<8x128xbf16>
    %59 = tpu.concatenate %51, %44, %58 in 1 : vector<8x128xbf16>, vector<8x128xbf16>, vector<8x128xbf16> -> vector<8x384xbf16>
    %60 = vector.extract_strided_slice %59 {offsets = [0, 116], sizes = [8, 128], strides = [1, 1]} : vector<8x384xbf16> to vector<8x128xbf16>
    %61 = vector.extract_strided_slice %59 {offsets = [0, 117], sizes = [8, 128], strides = [1, 1]} : vector<8x384xbf16> to vector<8x128xbf16>
    %62 = vector.extract_strided_slice %59 {offsets = [0, 118], sizes = [8, 128], strides = [1, 1]} : vector<8x384xbf16> to vector<8x128xbf16>
    %63 = vector.extract_strided_slice %59 {offsets = [0, 119], sizes = [8, 128], strides = [1, 1]} : vector<8x384xbf16> to vector<8x128xbf16>
    %64 = vector.extract_strided_slice %59 {offsets = [0, 120], sizes = [8, 128], strides = [1, 1]} : vector<8x384xbf16> to vector<8x128xbf16>
    %65 = vector.extract_strided_slice %59 {offsets = [0, 121], sizes = [8, 128], strides = [1, 1]} : vector<8x384xbf16> to vector<8x128xbf16>
    %66 = vector.extract_strided_slice %59 {offsets = [0, 122], sizes = [8, 128], strides = [1, 1]} : vector<8x384xbf16> to vector<8x128xbf16>
    %67 = vector.extract_strided_slice %59 {offsets = [0, 123], sizes = [8, 128], strides = [1, 1]} : vector<8x384xbf16> to vector<8x128xbf16>
    %68 = vector.extract_strided_slice %59 {offsets = [0, 124], sizes = [8, 128], strides = [1, 1]} : vector<8x384xbf16> to vector<8x128xbf16>
    %69 = vector.extract_strided_slice %59 {offsets = [0, 125], sizes = [8, 128], strides = [1, 1]} : vector<8x384xbf16> to vector<8x128xbf16>
    %70 = vector.extract_strided_slice %59 {offsets = [0, 126], sizes = [8, 128], strides = [1, 1]} : vector<8x384xbf16> to vector<8x128xbf16>
    %71 = vector.extract_strided_slice %59 {offsets = [0, 127], sizes = [8, 128], strides = [1, 1]} : vector<8x384xbf16> to vector<8x128xbf16>
    %72 = vector.extract_strided_slice %59 {offsets = [0, 128], sizes = [8, 128], strides = [1, 1]} : vector<8x384xbf16> to vector<8x128xbf16>
    %73 = vector.extract_strided_slice %59 {offsets = [0, 129], sizes = [8, 128], strides = [1, 1]} : vector<8x384xbf16> to vector<8x128xbf16>
    %74 = vector.extract_strided_slice %59 {offsets = [0, 130], sizes = [8, 128], strides = [1, 1]} : vector<8x384xbf16> to vector<8x128xbf16>
    %75 = vector.extract_strided_slice %59 {offsets = [0, 131], sizes = [8, 128], strides = [1, 1]} : vector<8x384xbf16> to vector<8x128xbf16>
    %76 = vector.extract_strided_slice %59 {offsets = [0, 132], sizes = [8, 128], strides = [1, 1]} : vector<8x384xbf16> to vector<8x128xbf16>
    %77 = vector.extract_strided_slice %59 {offsets = [0, 133], sizes = [8, 128], strides = [1, 1]} : vector<8x384xbf16> to vector<8x128xbf16>
    %78 = vector.extract_strided_slice %59 {offsets = [0, 134], sizes = [8, 128], strides = [1, 1]} : vector<8x384xbf16> to vector<8x128xbf16>
    %79 = vector.extract_strided_slice %59 {offsets = [0, 135], sizes = [8, 128], strides = [1, 1]} : vector<8x384xbf16> to vector<8x128xbf16>
    %80 = vector.extract_strided_slice %59 {offsets = [0, 136], sizes = [8, 128], strides = [1, 1]} : vector<8x384xbf16> to vector<8x128xbf16>
    %81 = vector.extract_strided_slice %59 {offsets = [0, 137], sizes = [8, 128], strides = [1, 1]} : vector<8x384xbf16> to vector<8x128xbf16>
    %82 = vector.extract_strided_slice %59 {offsets = [0, 138], sizes = [8, 128], strides = [1, 1]} : vector<8x384xbf16> to vector<8x128xbf16>
    %83 = vector.extract_strided_slice %59 {offsets = [0, 139], sizes = [8, 128], strides = [1, 1]} : vector<8x384xbf16> to vector<8x128xbf16>
    %84 = vector.extract_strided_slice %59 {offsets = [0, 140], sizes = [8, 128], strides = [1, 1]} : vector<8x384xbf16> to vector<8x128xbf16>
    %85 = tpu.concatenate %60, %61, %62, %63, %64, %65, %66, %67, %68, %69, %70, %71, %72, %73, %74, %75 in 0 : vector<8x128xbf16>, vector<8x128xbf16>, vector<8x128xbf16>, vector<8x128xbf16>, vector<8x128xbf16>, vector<8x128xbf16>, vector<8x128xbf16>, vector<8x128xbf16>, vector<8x128xbf16>, vector<8x128xbf16>, vector<8x128xbf16>, vector<8x128xbf16>, vector<8x128xbf16>, vector<8x128xbf16>, vector<8x128xbf16>, vector<8x128xbf16> -> vector<128x128xbf16>
    %86 = tpu.concatenate %76, %77, %78, %79, %80, %81, %82, %83, %84 in 0 : vector<8x128xbf16>, vector<8x128xbf16>, vector<8x128xbf16>, vector<8x128xbf16>, vector<8x128xbf16>, vector<8x128xbf16>, vector<8x128xbf16>, vector<8x128xbf16>, vector<8x128xbf16> -> vector<72x128xbf16>
    %87 = tpu.concatenate %85, %86 in 0 : vector<128x128xbf16>, vector<72x128xbf16> -> vector<200x128xbf16>
    %c0_23 = arith.constant 0 : index
    %c0_24 = arith.constant 0 : index
    %88 = vector.load %arg6[%c0_23, %c0_24] : memref<8x200xbf16, #tpu.memory_space<vmem>>, vector<8x200xbf16>
    %cst_25 = arith.constant dense<0.000000e+00> : vector<8x128xf32>
    %89 = tpu.matmul %88, %87, %cst_25 {dimension_numbers = #tpu.dot_dimension_numbers<[1], [0], [0], [1], [0, 0, 1, 1], [], []>} : vector<8x200xbf16>, vector<200x128xbf16>, vector<8x128xf32> -> vector<8x128xf32>
    %c0_26 = arith.constant 0 : index
    %c0_27 = arith.constant 0 : index
    %90 = vector.load %arg9[%c0_26, %c0_27] : memref<8x1xf32, #tpu.memory_space<vmem>>, vector<8x1xf32>
    %91 = vector.broadcast %90 : vector<8x1xf32> to vector<8x128xf32>
    %92 = arith.addf %89, %91 : vector<8x128xf32>
    %cst_28 = arith.constant 0.000000e+00 : f32
    %93 = vector.broadcast %cst_28 : f32 to vector<8x128xf32>
    %94 = arith.maximumf %92, %93 : vector<8x128xf32>
    %95 = arith.truncf %94 : vector<8x128xf32> to vector<8x128xbf16>
    %c0_29 = arith.constant 0 : index
    %c0_30 = arith.constant 0 : index
    %96 = vector.load %arg7[%c0_29, %c0_30] : memref<32x8xbf16, #tpu.memory_space<vmem>>, vector<32x8xbf16>
    %cst_31 = arith.constant dense<0.000000e+00> : vector<32x128xf32>
    %97 = tpu.matmul %96, %95, %cst_31 {dimension_numbers = #tpu.dot_dimension_numbers<[1], [0], [0], [1], [0, 0, 1, 1], [], []>} : vector<32x8xbf16>, vector<8x128xbf16>, vector<32x128xf32> -> vector<32x128xf32>
    %c0_32 = arith.constant 0 : index
    %c0_33 = arith.constant 0 : index
    %98 = vector.load %arg10[%c0_32, %c0_33] : memref<32x1xf32, #tpu.memory_space<vmem>>, vector<32x1xf32>
    %99 = vector.broadcast %98 : vector<32x1xf32> to vector<32x128xf32>
    %100 = arith.addf %97, %99 : vector<32x128xf32>
    %101 = arith.addf %100, %2 : vector<32x128xf32>
    %cst_34 = arith.constant 0.000000e+00 : f32
    %102 = vector.broadcast %cst_34 : f32 to vector<32x128xf32>
    %103 = arith.maximumf %101, %102 : vector<32x128xf32>
    %c0_35 = arith.constant 0 : index
    %c0_36 = arith.constant 0 : index
    %c0_37 = arith.constant 0 : index
    %104 = vector.load %arg11[%c0_35, %c0_36, %c0_37] : memref<1x32x128xf32, #tpu.memory_space<vmem>>, vector<1x32x128xf32>
    %105 = vector.shape_cast %104 : vector<1x32x128xf32> to vector<32x128xf32>
    %106 = vector.shape_cast %103 : vector<32x128xf32> to vector<1x32x128xf32>
    tpu.vector_store %arg11[%c0_35, %c0_36, %c0_37], %106 {strides = array<i32>} : memref<1x32x128xf32, #tpu.memory_space<vmem>>, vector<1x32x128xf32>,
    return
  }
  func.func @transform_0(%arg0: i32, %arg1: i32) -> (i32, i32, i32) {
    %c0_i32 = arith.constant 0 : i32
    %c0_i32_0 = arith.constant 0 : i32
    return %arg0, %c0_i32, %arg1 : i32, i32, i32
  }
  func.func @transform_1(%arg0: i32, %arg1: i32) -> (i32, i32, i32) {
    %c1_i32 = arith.constant 1 : i32
    %0 = arith.muli %arg1, %c1_i32 : i32
    %c1_i32_0 = arith.constant 1 : i32
    %1 = arith.subi %0, %c1_i32_0 : i32
    %c0_i32 = arith.constant 0 : i32
    %2 = arith.maxsi %1, %c0_i32 : i32
    %c0_i32_1 = arith.constant 0 : i32
    %c0_i32_2 = arith.constant 0 : i32
    return %arg0, %c0_i32_1, %2 : i32, i32, i32
  }
  func.func @transform_2(%arg0: i32, %arg1: i32) -> (i32, i32, i32) {
    %c1_i32 = arith.constant 1 : i32
    %0 = arith.addi %arg1, %c1_i32 : i32
    %c1_i32_0 = arith.constant 1 : i32
    %1 = arith.muli %0, %c1_i32_0 : i32
    %c1_i32_1 = arith.constant 1 : i32
    %2 = arith.minsi %1, %c1_i32_1 : i32
    %c0_i32 = arith.constant 0 : i32
    %c0_i32_2 = arith.constant 0 : i32
    return %arg0, %c0_i32, %2 : i32, i32, i32
  }
  func.func @transform_3(%arg0: i32, %arg1: i32) -> (i32, i32) {
    %c0_i32 = arith.constant 0 : i32
    %c0_i32_0 = arith.constant 0 : i32
    %c0_i32_1 = arith.constant 0 : i32
    return %c0_i32, %c0_i32_0 : i32, i32
  }
  func.func @transform_4(%arg0: i32, %arg1: i32) -> (i32, i32) {
    %c0_i32 = arith.constant 0 : i32
    %c0_i32_0 = arith.constant 0 : i32
    %c0_i32_1 = arith.constant 0 : i32
    return %c0_i32, %c0_i32_0 : i32, i32
  }
  func.func @transform_5(%arg0: i32, %arg1: i32) -> (i32, i32) {
    %c0_i32 = arith.constant 0 : i32
    %c0_i32_0 = arith.constant 0 : i32
    %c0_i32_1 = arith.constant 0 : i32
    return %c0_i32, %c0_i32_0 : i32, i32
  }
  func.func @transform_6(%arg0: i32, %arg1: i32) -> (i32, i32) {
    %c0_i32 = arith.constant 0 : i32
    %c0_i32_0 = arith.constant 0 : i32
    %c0_i32_1 = arith.constant 0 : i32
    return %c0_i32, %c0_i32_0 : i32, i32
  }
  func.func @transform_7(%arg0: i32, %arg1: i32) -> (i32, i32) {
    %c0_i32 = arith.constant 0 : i32
    %c0_i32_0 = arith.constant 0 : i32
    %c0_i32_1 = arith.constant 0 : i32
    return %c0_i32, %c0_i32_0 : i32, i32
  }
  func.func @transform_8(%arg0: i32, %arg1: i32) -> (i32, i32) {
    %c0_i32 = arith.constant 0 : i32
    %c0_i32_0 = arith.constant 0 : i32
    %c0_i32_1 = arith.constant 0 : i32
    return %c0_i32, %c0_i32_0 : i32, i32
  }
  func.func @transform_9(%arg0: i32, %arg1: i32) -> (i32, i32, i32) {
    %c0_i32 = arith.constant 0 : i32
    %c0_i32_0 = arith.constant 0 : i32
    return %arg0, %c0_i32, %arg1 : i32, i32, i32
  }
}

</mosaic_0001>

<llo_original>
// kernel: tpu_custom_call.1
$region0: #{tpu_custom_call.1}
  #allocation0 [shape = 'u32[]', space=smem, size = 0x4, offset = 0x4, fixed_abs, tag = 'smem constant byte address 0x4 - core index']
  #allocation1 [shape = 'u32[144,128]{1,0:T(1,128)}', space=vmem, size = 0x12000, scoped, tag = 'internal scratch']
  %s0 = inlined_call_operand.hbm [shape: f32[2,32,192], index: 0, kind: input, shape index: {}]
  %s1 = inlined_call_operand.hbm [shape: f32[2,32,192], index: 1, kind: input, shape index: {}]
  %s2 = inlined_call_operand.hbm [shape: f32[2,32,192], index: 2, kind: input, shape index: {}]
  %s3 = inlined_call_operand.vmem [shape: bf16[8,32], index: 3, kind: input, shape index: {}]
  %s4 = inlined_call_operand.vmem [shape: bf16[8,200], index: 4, kind: input, shape index: {}]
  %s5 = inlined_call_operand.vmem [shape: bf16[32,8], index: 5, kind: input, shape index: {}]
  %s6 = inlined_call_operand.vmem [shape: f32[8,1], index: 6, kind: input, shape index: {}]
  %s7 = inlined_call_operand.vmem [shape: f32[8,1], index: 7, kind: input, shape index: {}]
  %s8 = inlined_call_operand.vmem [shape: f32[32,1], index: 8, kind: input, shape index: {}]
  %s9 = inlined_call_operand.hbm [shape: f32[2,32,192], index: 9, kind: output, shape index: {}]
  %s10 = sld [smem:[#allocation0]]
  $region81: #{tpu_custom_call.1} parent=0
    _
  %s12 = ssub.s32 1, %s10
  %s13 = scalar_select 0, %s12, %s10
  $region1: #{tpu_custom_call.1} parent=0
    #allocation2 [shape = 'u8[32768]{0}', space=vmem, size = 0x8000, scoped, tag = 'input window, operand 0']
    #allocation3 [shape = 's32[2]{0}', space=sflag, size = 0x8, scoped, tag = 'scoped memory for tpu_custom_call.1']
    #allocation4 [shape = 's32[2]{0}', space=sflag, size = 0x8, scoped, tag = 'scoped memory for tpu_custom_call.1']
    #allocation5 [shape = 'u8[32768]{0}', space=vmem, size = 0x8000, scoped, tag = 'input window, operand 1']
    #allocation6 [shape = 's32[2]{0}', space=sflag, size = 0x8, scoped, tag = 'scoped memory for tpu_custom_call.1']
    #allocation7 [shape = 'u8[32768]{0}', space=vmem, size = 0x8000, scoped, tag = 'input window, operand 2']
    #allocation8 [shape = 'u8[32768]{0}', space=vmem, size = 0x8000, scoped, tag = 'output window, operand 0']
    %14 = vsyncpa [#allocation3], 0
    %s15 = scalar_lea.sflag [#allocation3], 1
    %16 = vsyncpa %s15, 0
    %17 = vsyncpa [#allocation6], 0
    %s18 = scalar_lea.sflag [#allocation6], 1
    %19 = vsyncpa %s18, 0
    %20 = vsyncpa [#allocation4], 0
    %s21 = scalar_lea.sflag [#allocation4], 1
    %22 = vsyncpa %s21, 0
    loop: start=0, step=1, limit=6
    $region2: #{tpu_custom_call.1} parent=1 // loop_pre_header
      _
    $region3: #{tpu_custom_call.1} parent=1 // loop_header
      %s24 = sphi 0, %s28
      %p25 = scmp.ge.s32.totalorder %s24, 6
      %s31 = sphi 0, %s43
      %s32 = sphi 0, %s39
      %s33 = sphi 0, %s31
      %s34 = sphi 0, %s32
      %s35 = sphi 0, %s33
      %s36 = sphi 0, %s34
      %s48 = sphi 0, %s50
      %s51 = sphi 0, %s48
      %s52 = sphi 0, %s51
      %s68 = sphi 0, %s52
      %s82 = sphi 0, %s84
      %s85 = sphi 0, %s82
      %s86 = sphi 0, %s85
      %s102 = sphi 0, %s86
      %s116 = sphi 0, %s118
      %s119 = sphi 0, %s116
      %s120 = sphi 0, %s119
      %s136 = sphi 0, %s120
      %s140 = sphi 0, %s140
      %s142 = sphi 0, %s140
      %s143 = sphi 0, %s142
      %s157 = sphi 0, %s143
      %s161 = sphi 0, %s161
      %s163 = sphi 0, %s161
      %s164 = sphi 0, %s163
      %s178 = sphi 0, %s164
      %s182 = sphi 0, %s182
      %s184 = sphi 0, %s182
      %s185 = sphi 0, %s184
      %s199 = sphi 0, %s185
      %s203 = sphi 0, %s203
      %s205 = sphi 0, %s203
      %s206 = sphi 0, %s205
      %s220 = sphi 0, %s206
      %s224 = sphi 0, %s224
      %s226 = sphi 0, %s224
      %s227 = sphi 0, %s226
      %s241 = sphi 0, %s227
      %s245 = sphi 0, %s245
      %s247 = sphi 0, %s245
      %s248 = sphi 0, %s247
      %s262 = sphi 0, %s248
      %s270 = sphi 0, %s272
      %s273 = sphi 0, %s270
      %s274 = sphi 0, %s273
      %s290 = sphi 0, %s274
    $region4: #{tpu_custom_call.1} parent=1 // loop_header_branch
      %27 = sbr.rel (%p25) target = $region8
    $region5: #{tpu_custom_call.1} parent=1 // loop_body
      %s29 = ssub.s32 %s24, 1
      %s30 = ssub.s32 %s24, 2
      %s37 = sadd.s32 1, %s32
      %p38 = scmp.ge.s32.totalorder %s37, 2
      %s39 = scalar_select %p38, 0, %s37
      %s40 = sadd.s32 1, %s31
      %s41 = scalar_select %p38, %s40, %s31
      %p42 = scmp.ge.s32.totalorder %s41, 2
      %s43 = scalar_select %p42, 0, %s41
      %s44 = ssub.s32 %s31, %s43
      %s45 = ssub.s32 %s32, %s39
      %s46 = sor.u32 %s44, %s45
      %p47 = scmp.eq.s32.totalorder %s46, 0
      %s49 = sadd.s32 %s48, 1
      %s50 = scalar_select %p47, %s48, %s49
      %p53 = pneg %p47
      %p54 = scmp.eq.s32.totalorder %s24, 3
      %p55 = por %p53, %p54
      %p56 = scmp.ne.s32.totalorder %s48, %s51
      %p57 = scmp.eq.s32.totalorder %s24, 0
      %p58 = por %p56, %p57
      %p59 = scmp.ne.s32.totalorder %s48, %s51
      %p60 = scmp.eq.s32.totalorder %s29, 3
      %p61 = por %p59, %p60
      %p62 = scmp.ne.s32.totalorder %s51, %s52
      %p63 = scmp.eq.s32.totalorder %s29, 0
      %p64 = por %p62, %p63
      %p65 = scmp.ne.s32.totalorder %s51, %s52
      %p66 = scmp.eq.s32.totalorder %s30, 3
      %p67 = por %p65, %p66
      %p69 = scmp.ne.s32.totalorder %s52, %s68
      %p70 = scmp.eq.s32.totalorder %s30, 0
      %p71 = por %p69, %p70
      %s72 = ssub.s32 %s32, 1
      %p73 = scmp.gt.s32.totalorder %s72, 0
      %s74 = scalar_select %p73, %s72, 0
      %s75 = ssub.s32 %s39, 1
      %p76 = scmp.gt.s32.totalorder %s75, 0
      %s77 = scalar_select %p76, %s75, 0
      %s78 = ssub.s32 %s31, %s43
      %s79 = ssub.s32 %s74, %s77
      %s80 = sor.u32 %s78, %s79
      %p81 = scmp.eq.s32.totalorder %s80, 0
      %s83 = sadd.s32 %s82, 1
      %s84 = scalar_select %p81, %s82, %s83
      %p87 = pneg %p81
      %p88 = scmp.eq.s32.totalorder %s24, 3
      %p89 = por %p87, %p88
      %p90 = scmp.ne.s32.totalorder %s82, %s85
      %p91 = scmp.eq.s32.totalorder %s24, 0
      %p92 = por %p90, %p91
      %p93 = scmp.ne.s32.totalorder %s82, %s85
      %p94 = scmp.eq.s32.totalorder %s29, 3
      %p95 = por %p93, %p94
      %p96 = scmp.ne.s32.totalorder %s85, %s86
      %p97 = scmp.eq.s32.totalorder %s29, 0
      %p98 = por %p96, %p97
      %p99 = scmp.ne.s32.totalorder %s85, %s86
      %p100 = scmp.eq.s32.totalorder %s30, 3
      %p101 = por %p99, %p100
      %p103 = scmp.ne.s32.totalorder %s86, %s102
      %p104 = scmp.eq.s32.totalorder %s30, 0
      %p105 = por %p103, %p104
      %s106 = sadd.s32 %s32, 1
      %p107 = scmp.lt.s32.totalorder %s106, 1
      %s108 = scalar_select %p107, %s106, 1
      %s109 = sadd.s32 %s39, 1
      %p110 = scmp.lt.s32.totalorder %s109, 1
      %s111 = scalar_select %p110, %s109, 1
      %s112 = ssub.s32 %s31, %s43
      %s113 = ssub.s32 %s108, %s111
      %s114 = sor.u32 %s112, %s113
      %p115 = scmp.eq.s32.totalorder %s114, 0
      %s117 = sadd.s32 %s116, 1
      %s118 = scalar_select %p115, %s116, %s117
      %p121 = pneg %p115
      %p122 = scmp.eq.s32.totalorder %s24, 3
      %p123 = por %p121, %p122
      %p124 = scmp.ne.s32.totalorder %s116, %s119
      %p125 = scmp.eq.s32.totalorder %s24, 0
      %p126 = por %p124, %p125
      %p127 = scmp.ne.s32.totalorder %s116, %s119
      %p128 = scmp.eq.s32.totalorder %s29, 3
      %p129 = por %p127, %p128
      %p130 = scmp.ne.s32.totalorder %s119, %s120
      %p131 = scmp.eq.s32.totalorder %s29, 0
      %p132 = por %p130, %p131
      %p133 = scmp.ne.s32.totalorder %s119, %s120
      %p134 = scmp.eq.s32.totalorder %s30, 3
      %p135 = por %p133, %p134
      %p137 = scmp.ne.s32.totalorder %s120, %s136
      %p138 = scmp.eq.s32.totalorder %s30, 0
      %p139 = por %p137, %p138
      %s141 = sadd.s32 %s140, 1
      %p144 = scmp.eq.s32.totalorder %s24, 3
      %p145 = scmp.ne.s32.totalorder %s140, %s142
      %p146 = scmp.eq.s32.totalorder %s24, 0
      %p147 = por %p145, %p146
      %p148 = scmp.ne.s32.totalorder %s140, %s142
      %p149 = scmp.eq.s32.totalorder %s29, 3
      %p150 = por %p148, %p149
      %p151 = scmp.ne.s32.totalorder %s142, %s143
      %p152 = scmp.eq.s32.totalorder %s29, 0
      %p153 = por %p151, %p152
      %p154 = scmp.ne.s32.totalorder %s142, %s143
      %p155 = scmp.eq.s32.totalorder %s30, 3
      %p156 = por %p154, %p155
      %p158 = scmp.ne.s32.totalorder %s143, %s157
      %p159 = scmp.eq.s32.totalorder %s30, 0
      %p160 = por %p158, %p159
      %s162 = sadd.s32 %s161, 1
      %p165 = scmp.eq.s32.totalorder %s24, 3
      %p166 = scmp.ne.s32.totalorder %s161, %s163
      %p167 = scmp.eq.s32.totalorder %s24, 0
      %p168 = por %p166, %p167
      %p169 = scmp.ne.s32.totalorder %s161, %s163
      %p170 = scmp.eq.s32.totalorder %s29, 3
      %p171 = por %p169, %p170
      %p172 = scmp.ne.s32.totalorder %s163, %s164
      %p173 = scmp.eq.s32.totalorder %s29, 0
      %p174 = por %p172, %p173
      %p175 = scmp.ne.s32.totalorder %s163, %s164
      %p176 = scmp.eq.s32.totalorder %s30, 3
      %p177 = por %p175, %p176
      %p179 = scmp.ne.s32.totalorder %s164, %s178
      %p180 = scmp.eq.s32.totalorder %s30, 0
      %p181 = por %p179, %p180
      %s183 = sadd.s32 %s182, 1
      %p186 = scmp.eq.s32.totalorder %s24, 3
      %p187 = scmp.ne.s32.totalorder %s182, %s184
      %p188 = scmp.eq.s32.totalorder %s24, 0
      %p189 = por %p187, %p188
      %p190 = scmp.ne.s32.totalorder %s182, %s184
      %p191 = scmp.eq.s32.totalorder %s29, 3
      %p192 = por %p190, %p191
      %p193 = scmp.ne.s32.totalorder %s184, %s185
      %p194 = scmp.eq.s32.totalorder %s29, 0
      %p195 = por %p193, %p194
      %p196 = scmp.ne.s32.totalorder %s184, %s185
      %p197 = scmp.eq.s32.totalorder %s30, 3
      %p198 = por %p196, %p197
      %p200 = scmp.ne.s32.totalorder %s185, %s199
      %p201 = scmp.eq.s32.totalorder %s30, 0
      %p202 = por %p200, %p201
      %s204 = sadd.s32 %s203, 1
      %p207 = scmp.eq.s32.totalorder %s24, 3
      %p208 = scmp.ne.s32.totalorder %s203, %s205
      %p209 = scmp.eq.s32.totalorder %s24, 0
      %p210 = por %p208, %p209
      %p211 = scmp.ne.s32.totalorder %s203, %s205
      %p212 = scmp.eq.s32.totalorder %s29, 3
      %p213 = por %p211, %p212
      %p214 = scmp.ne.s32.totalorder %s205, %s206
      %p215 = scmp.eq.s32.totalorder %s29, 0
      %p216 = por %p214, %p215
      %p217 = scmp.ne.s32.totalorder %s205, %s206
      %p218 = scmp.eq.s32.totalorder %s30, 3
      %p219 = por %p217, %p218
      %p221 = scmp.ne.s32.totalorder %s206, %s220
      %p222 = scmp.eq.s32.totalorder %s30, 0
      %p223 = por %p221, %p222
      %s225 = sadd.s32 %s224, 1
      %p228 = scmp.eq.s32.totalorder %s24, 3
      %p229 = scmp.ne.s32.totalorder %s224, %s226
      %p230 = scmp.eq.s32.totalorder %s24, 0
      %p231 = por %p229, %p230
      %p232 = scmp.ne.s32.totalorder %s224, %s226
      %p233 = scmp.eq.s32.totalorder %s29, 3
      %p234 = por %p232, %p233
      %p235 = scmp.ne.s32.totalorder %s226, %s227
      %p236 = scmp.eq.s32.totalorder %s29, 0
      %p237 = por %p235, %p236
      %p238 = scmp.ne.s32.totalorder %s226, %s227
      %p239 = scmp.eq.s32.totalorder %s30, 3
      %p240 = por %p238, %p239
      %p242 = scmp.ne.s32.totalorder %s227, %s241
      %p243 = scmp.eq.s32.totalorder %s30, 0
      %p244 = por %p242, %p243
      %s246 = sadd.s32 %s245, 1
      %p249 = scmp.eq.s32.totalorder %s24, 3
      %p250 = scmp.ne.s32.totalorder %s245, %s247
      %p251 = scmp.eq.s32.totalorder %s24, 0
      %p252 = por %p250, %p251
      %p253 = scmp.ne.s32.totalorder %s245, %s247
      %p254 = scmp.eq.s32.totalorder %s29, 3
      %p255 = por %p253, %p254
      %p256 = scmp.ne.s32.totalorder %s247, %s248
      %p257 = scmp.eq.s32.totalorder %s29, 0
      %p258 = por %p256, %p257
      %p259 = scmp.ne.s32.totalorder %s247, %s248
      %p260 = scmp.eq.s32.totalorder %s30, 3
      %p261 = por %p259, %p260
      %p263 = scmp.ne.s32.totalorder %s248, %s262
      %p264 = scmp.eq.s32.totalorder %s30, 0
      %p265 = por %p263, %p264
      %s266 = ssub.s32 %s31, %s43
      %s267 = ssub.s32 %s32, %s39
      %s268 = sor.u32 %s266, %s267
      %p269 = scmp.eq.s32.totalorder %s268, 0
      %s271 = sadd.s32 %s270, 1
      %s272 = scalar_select %p269, %s270, %s271
      %p275 = pneg %p269
      %p276 = scmp.eq.s32.totalorder %s24, 3
      %p277 = por %p275, %p276
      %p278 = scmp.ne.s32.totalorder %s270, %s273
      %p279 = scmp.eq.s32.totalorder %s24, 0
      %p280 = por %p278, %p279
      %p281 = scmp.ne.s32.totalorder %s270, %s273
      %p282 = scmp.eq.s32.totalorder %s29, 3
      %p283 = por %p281, %p282
      %p284 = scmp.ne.s32.totalorder %s273, %s274
      %p285 = scmp.eq.s32.totalorder %s29, 0
      %p286 = por %p284, %p285
      %p287 = scmp.ne.s32.totalorder %s273, %s274
      %p288 = scmp.eq.s32.totalorder %s30, 3
      %p289 = por %p287, %p288
      %p291 = scmp.ne.s32.totalorder %s274, %s290
      %p292 = scmp.eq.s32.totalorder %s30, 0
      %p293 = por %p291, %p292
      %p294 = scmp.le.s32.totalorder 1, %s24
      %p295 = scmp.lt.s32.totalorder %s24, 5
      %p296 = pnand %p294, %p295
      %p297 = pneg %p296
      // Predicated region
      $region9: #{tpu_custom_call.1} parent=5 // pred_check
        _
      $region10: #{tpu_custom_call.1} parent=5 // pred_check_branch
        %299 = sbr.rel (%p296) target = $region12
      $region11: #{tpu_custom_call.1} parent=5 // pred_region
        %s300 = ssub.s32 %s24, 1
        // Predicated region
        $region13: #{tpu_custom_call.1} parent=11 // pred_check
          %p301 = pneg %p153
        $region14: #{tpu_custom_call.1} parent=11 // pred_check_branch
          %303 = sbr.rel (%p301) target = $region16
        $region15: #{tpu_custom_call.1} parent=11 // pred_region
          _
        $region16: #{tpu_custom_call.1} parent=11 // pred_fallthru
          _
        // Predicated region
        $region17: #{tpu_custom_call.1} parent=11 // pred_check
          %p304 = pneg %p174
        $region18: #{tpu_custom_call.1} parent=11 // pred_check_branch
          %306 = sbr.rel (%p304) target = $region20
        $region19: #{tpu_custom_call.1} parent=11 // pred_region
          _
        $region20: #{tpu_custom_call.1} parent=11 // pred_fallthru
          _
        // Predicated region
        $region21: #{tpu_custom_call.1} parent=11 // pred_check
          %p307 = pneg %p195
        $region22: #{tpu_custom_call.1} parent=11 // pred_check_branch
          %309 = sbr.rel (%p307) target = $region24
        $region23: #{tpu_custom_call.1} parent=11 // pred_region
          _
        $region24: #{tpu_custom_call.1} parent=11 // pred_fallthru
          _
        // Predicated region
        $region25: #{tpu_custom_call.1} parent=11 // pred_check
          %p310 = pneg %p216
        $region26: #{tpu_custom_call.1} parent=11 // pred_check_branch
          %312 = sbr.rel (%p310) target = $region28
        $region27: #{tpu_custom_call.1} parent=11 // pred_region
          _
        $region28: #{tpu_custom_call.1} parent=11 // pred_fallthru
          _
        // Predicated region
        $region29: #{tpu_custom_call.1} parent=11 // pred_check
          %p313 = pneg %p237
        $region30: #{tpu_custom_call.1} parent=11 // pred_check_branch
          %315 = sbr.rel (%p313) target = $region32
        $region31: #{tpu_custom_call.1} parent=11 // pred_region
          _
        $region32: #{tpu_custom_call.1} parent=11 // pred_fallthru
          _
        // Predicated region
        $region33: #{tpu_custom_call.1} parent=11 // pred_check
          %p316 = pneg %p258
        $region34: #{tpu_custom_call.1} parent=11 // pred_check_branch
          %318 = sbr.rel (%p316) target = $region36
        $region35: #{tpu_custom_call.1} parent=11 // pred_region
          _
        $region36: #{tpu_custom_call.1} parent=11 // pred_fallthru
          _
      $region12: #{tpu_custom_call.1} parent=5 // pred_fallthru
        _
      %p319 = scmp.lt.s32.totalorder %s24, 4
      // Predicated region
      $region37: #{tpu_custom_call.1} parent=5 // pred_check
        %p320 = pneg %p319
      $region38: #{tpu_custom_call.1} parent=5 // pred_check_branch
        %322 = sbr.rel (%p320) target = $region40
      $region39: #{tpu_custom_call.1} parent=5 // pred_region
        // Predicated region
        $region41: #{tpu_custom_call.1} parent=39 // pred_check
          %p323 = pneg %p58
        $region42: #{tpu_custom_call.1} parent=39 // pred_check_branch
          %325 = sbr.rel (%p323) target = $region44
        $region43: #{tpu_custom_call.1} parent=39 // pred_region
          %s326 = sand.u32 %s48, 1
          %s327 = scalar_lea.sflag [#allocation3], %s326
          %s328 = sand.u32 %s48, 1
          %s329 = smul.addr %s328, 32
          %s330 = scalar_lea.vmem [#allocation2], %s329
          %s332 = ssub.s32 512, 512
          %333 = vsyncadd %s327, %s332
          %s334 = smul.addr %s31, 8
          %s335 = sadd.s32 %s32, %s334
          %s336 = smul.addr %s335, 128
          %s337 = scalar_lea.hbm %s0, %s336
          %s338 = sshll.u32 %s330, 4
          %s339 = int_to_ptr.vmem [resolvable:$true] %s338
          %344 = dma.hbm_to_vmem [thread:$0]  %s337, 512, %s339, %s327, 256, 128, 8
        $region44: #{tpu_custom_call.1} parent=39 // pred_fallthru
          _
        // Predicated region
        $region45: #{tpu_custom_call.1} parent=39 // pred_check
          %p345 = pneg %p92
        $region46: #{tpu_custom_call.1} parent=39 // pred_check_branch
          %347 = sbr.rel (%p345) target = $region48
        $region47: #{tpu_custom_call.1} parent=39 // pred_region
          %s348 = sand.u32 %s24, 1
          %s349 = scalar_lea.sflag [#allocation6], %s348
          %s350 = sand.u32 %s82, 1
          %s351 = smul.addr %s350, 32
          %s352 = scalar_lea.vmem [#allocation5], %s351
          %s353 = ssub.s32 %s32, 1
          %p354 = scmp.gt.s32.totalorder %s353, 0
          %s355 = scalar_select %p354, %s353, 0
          %s357 = ssub.s32 512, 512
          %358 = vsyncadd %s349, %s357
          %s359 = smul.addr %s31, 8
          %s360 = sadd.s32 %s355, %s359
          %s361 = smul.addr %s360, 128
          %s362 = scalar_lea.hbm %s1, %s361
          %s363 = sshll.u32 %s352, 4
          %s364 = int_to_ptr.vmem [resolvable:$true] %s363
          %369 = dma.hbm_to_vmem [thread:$0]  %s362, 512, %s364, %s349, 256, 128, 8
        $region48: #{tpu_custom_call.1} parent=39 // pred_fallthru
          _
        // Predicated region
        $region49: #{tpu_custom_call.1} parent=39 // pred_check
          %p370 = pneg %p126
        $region50: #{tpu_custom_call.1} parent=39 // pred_check_branch
          %372 = sbr.rel (%p370) target = $region52
        $region51: #{tpu_custom_call.1} parent=39 // pred_region
          %s373 = sand.u32 %s24, 1
          %s374 = scalar_lea.sflag [#allocation6], %s373
          %s375 = sand.u32 %s116, 1
          %s376 = smul.addr %s375, 32
          %s377 = scalar_lea.vmem [#allocation7], %s376
          %s378 = sadd.s32 %s32, 1
          %p379 = scmp.lt.s32.totalorder %s378, 1
          %s380 = scalar_select %p379, %s378, 1
          %s382 = ssub.s32 512, 512
          %383 = vsyncadd %s374, %s382
          %s384 = smul.addr %s31, 8
          %s385 = sadd.s32 %s380, %s384
          %s386 = smul.addr %s385, 128
          %s387 = scalar_lea.hbm %s2, %s386
          %s388 = sshll.u32 %s377, 4
          %s389 = int_to_ptr.vmem [resolvable:$true] %s388
          %394 = dma.hbm_to_vmem [thread:$0]  %s387, 512, %s389, %s374, 256, 128, 8
        $region52: #{tpu_custom_call.1} parent=39 // pred_fallthru
          _
      $region40: #{tpu_custom_call.1} parent=5 // pred_fallthru
        _
      %p395 = scmp.le.s32.totalorder 1, %s24
      %p396 = scmp.lt.s32.totalorder %s24, 5
      %p397 = pnand %p395, %p396
      %p398 = pneg %p397
      // Predicated region
      $region53: #{tpu_custom_call.1} parent=5 // pred_check
        _
      $region54: #{tpu_custom_call.1} parent=5 // pred_check_branch
        %400 = sbr.rel (%p397) target = $region56
      $region55: #{tpu_custom_call.1} parent=5 // pred_region
        %s401 = ssub.s32 %s24, 1
        %s402 = sand.u32 %s51, 1
        %s403 = scalar_lea.sflag [#allocation3], %s402
        %s404 = sand.u32 %s51, 1
        %s405 = smul.addr %s404, 32
        %s406 = scalar_lea.vmem [#allocation2], %s405
        // Predicated region
        $region57: #{tpu_custom_call.1} parent=55 // pred_check
          %p407 = pneg %p64
        $region58: #{tpu_custom_call.1} parent=55 // pred_check_branch
          %409 = sbr.rel (%p407) target = $region60
        $region59: #{tpu_custom_call.1} parent=55 // pred_region
          %410 = dma.done %s403, 512
        $region60: #{tpu_custom_call.1} parent=55 // pred_fallthru
          _
        %s411 = sand.u32 %s29, 1
        %s412 = scalar_lea.sflag [#allocation6], %s411
        %s413 = sand.u32 %s85, 1
        %s414 = smul.addr %s413, 32
        %s415 = scalar_lea.vmem [#allocation5], %s414
        // Predicated region
        $region61: #{tpu_custom_call.1} parent=55 // pred_check
          %p416 = pneg %p98
        $region62: #{tpu_custom_call.1} parent=55 // pred_check_branch
          %418 = sbr.rel (%p416) target = $region64
        $region63: #{tpu_custom_call.1} parent=55 // pred_region
          %419 = dma.done %s412, 512
        $region64: #{tpu_custom_call.1} parent=55 // pred_fallthru
          _
        %s420 = sand.u32 %s29, 1
        %s421 = scalar_lea.sflag [#allocation6], %s420
        %s422 = sand.u32 %s119, 1
        %s423 = smul.addr %s422, 32
        %s424 = scalar_lea.vmem [#allocation7], %s423
        // Predicated region
        $region65: #{tpu_custom_call.1} parent=55 // pred_check
          %p425 = pneg %p132
        $region66: #{tpu_custom_call.1} parent=55 // pred_check_branch
          %427 = sbr.rel (%p425) target = $region68
        $region67: #{tpu_custom_call.1} parent=55 // pred_region
          %428 = dma.done %s421, 512
        $region68: #{tpu_custom_call.1} parent=55 // pred_fallthru
          _
        %s429 = sand.u32 %s51, 1
        %s430 = scalar_lea.sflag [#allocation3], %s429
        %s431 = sand.u32 %s51, 1
        %s432 = smul.addr %s431, 32
        %s433 = scalar_lea.vmem [#allocation2], %s432
        %p434 = pneg %p64
        %p435 = pneg %p61
        %s436 = sand.u32 %s29, 1
        %s437 = scalar_lea.sflag [#allocation6], %s436
        %s438 = sand.u32 %s85, 1
        %s439 = smul.addr %s438, 32
        %s440 = scalar_lea.vmem [#allocation5], %s439
        %p441 = pneg %p98
        %p442 = pneg %p95
        %s443 = sand.u32 %s29, 1
        %s444 = scalar_lea.sflag [#allocation6], %s443
        %s445 = sand.u32 %s119, 1
        %s446 = smul.addr %s445, 32
        %s447 = scalar_lea.vmem [#allocation7], %s446
        %p448 = pneg %p132
        %p449 = pneg %p129
        %p450 = pneg %p153
        %p451 = pneg %p150
        %p452 = pneg %p174
        %p453 = pneg %p171
        %p454 = pneg %p195
        %p455 = pneg %p192
        %p456 = pneg %p216
        %p457 = pneg %p213
        %p458 = pneg %p237
        %p459 = pneg %p234
        %p460 = pneg %p258
        %p461 = pneg %p255
        %p462 = pneg %p286
        %p463 = pneg %p283
        %s464 = sand.u32 %s273, 1
        %s465 = scalar_lea.sflag [#allocation4], %s464
        %s466 = sand.u32 %s273, 1
        %s467 = smul.addr %s466, 32
        %s468 = scalar_lea.vmem [#allocation8], %s467
        %s469 = ssub.s32 %s34, 1
        %p470 = scmp.gt.s32.totalorder %s469, 0
        %s471 = scalar_select %p470, %s469, 0
        %s472 = sadd.s32 %s34, 1
        %p473 = scmp.lt.s32.totalorder %s472, 1
        %s474 = scalar_select %p473, %s472, 1
        %s476 = smul.u32 %s34, 128
        %v477 = vld [vmem:[%s406] sm:$0xff]
        %v478 = vld [vmem:[%s406 + $0x8] sm:$0xff]
        %v479 = vld [vmem:[%s406 + $0x10] sm:$0xff]
        %v480 = vld [vmem:[%s406 + $0x18] sm:$0xff]
        %v481 = vld [vmem:[%s415] sm:$0xff]
        %v482 = vld [vmem:[%s415 + $0x8] sm:$0xff]
        %v483 = vld [vmem:[%s415 + $0x10] sm:$0xff]
        %v484 = vld [vmem:[%s415 + $0x18] sm:$0xff]
        %v485 = vld [vmem:[%s424] sm:$0xff]
        %v486 = vld [vmem:[%s424 + $0x8] sm:$0xff]
        %v487 = vld [vmem:[%s424 + $0x10] sm:$0xff]
        %v488 = vld [vmem:[%s424 + $0x18] sm:$0xff]
        %v489 = vld [vmem:[%s3] sm:$0xf]
        %v490 = vld [vmem:[%s6] sm:$0xff]
        %v491 = vpack.c.bf16 %v478, %v477
        %v492 = vpack.c.bf16 %v480, %v479
        %494 = vset.pattern.permute.xlu0 0
        %495 = vperm.xlu0 %494, %v490
        %v496 = vpop.permute.xlu0 %495
        %vm498 = vcmask 261120
        %v500 = vsel %vm498, %v489, 0
        %502 = vmatprep.subr.bf16.mxu0 0
        %503 = vmatpush1.bf16.msra.mxu0 0
        %504 = vmatprep.subr.bf16.mxu0 0
        %505 = vmatpush1.bf16.msra.mxu0 0
        %506 = vmatprep.subr.bf16.mxu0 0
        %507 = vmatpush1.bf16.msra.mxu0 0
        %508 = vmatprep.subr.bf16.mxu0 0
        %509 = vmatpush1.bf16.msra.mxu0 0
        %510 = vmatprep.subr.bf16.mxu0 0
        %511 = vmatpush1.bf16.msra.mxu0 0
        %512 = vmatprep.subr.bf16.mxu0 0
        %513 = vmatpush1.bf16.msra.mxu0 0
        %514 = vmatprep.subr.bf16.mxu0 0
        %515 = vmatpush1.bf16.msra.mxu0 %v492
        %516 = vmatprep.subr.bf16.mxu0 0
        %517 = vmatpush1.bf16.msra.mxu0 %v491
        %518 = vmatprep.subr.bf16.mxu0 0
        %519 = vmatpush2.bf16.msra.mxu0 0
        %520 = vmatprep.subr.bf16.mxu0 0
        %521 = vmatpush2.bf16.msra.mxu0 0
        %522 = vmatprep.subr.bf16.mxu0 0
        %523 = vmatpush2.bf16.msra.mxu0 0
        %524 = vmatprep.subr.bf16.mxu0 0
        %525 = vmatpush2.bf16.msra.mxu0 0
        %526 = vmatprep.subr.bf16.mxu0 0
        %527 = vmatpush2.bf16.msra.mxu0 0
        %528 = vmatprep.subr.bf16.mxu0 0
        %529 = vmatpush2.bf16.msra.mxu0 0
        %530 = vmatprep.subr.bf16.mxu0 0
        %531 = vmatpush2.bf16.msra.mxu0 0
        %532 = vmatprep.subr.bf16.mxu0 0
        %533 = vmatpush2.bf16.msra.mxu0 0
        %534 = vmatprep.mubr.bf16.mxu0 0
        %535 = vmatmul.mubr.bf16.gmra.mxu0 %v500
        %v536 = vpop.f32.mrf.mxu0
        %v537 = vadd.f32 %v496, %v536
        %v538 = vpop.f32.mrf.mxu0
        %v539 = vpop.f32.mrf.mxu0
        %v540 = vpop.f32.mrf.mxu0
        %541 = vdwg.mxu0
        %v542 = vmax.f32 %v537, 0.0
        %v543 = vpack.c.bf16 %v482, %v481
        %v544 = vpack.c.bf16 %v484, %v483
        %545 = vmatprep.subr.bf16.mxu0 0
        %546 = vmatpush1.bf16.msra.mxu0 0
        %547 = vmatprep.subr.bf16.mxu0 0
        %548 = vmatpush1.bf16.msra.mxu0 0
        %549 = vmatprep.subr.bf16.mxu0 0
        %550 = vmatpush1.bf16.msra.mxu0 0
        %551 = vmatprep.subr.bf16.mxu0 0
        %552 = vmatpush1.bf16.msra.mxu0 0
        %553 = vmatprep.subr.bf16.mxu0 0
        %554 = vmatpush1.bf16.msra.mxu0 0
        %555 = vmatprep.subr.bf16.mxu0 0
        %556 = vmatpush1.bf16.msra.mxu0 0
        %557 = vmatprep.subr.bf16.mxu0 0
        %558 = vmatpush1.bf16.msra.mxu0 %v544
        %559 = vmatprep.subr.bf16.mxu0 0
        %560 = vmatpush1.bf16.msra.mxu0 %v543
        %561 = vmatprep.subr.bf16.mxu0 0
        %562 = vmatpush2.bf16.msra.mxu0 0
        %563 = vmatprep.subr.bf16.mxu0 0
        %564 = vmatpush2.bf16.msra.mxu0 0
        %565 = vmatprep.subr.bf16.mxu0 0
        %566 = vmatpush2.bf16.msra.mxu0 0
        %567 = vmatprep.subr.bf16.mxu0 0
        %568 = vmatpush2.bf16.msra.mxu0 0
        %569 = vmatprep.subr.bf16.mxu0 0
        %570 = vmatpush2.bf16.msra.mxu0 0
        %571 = vmatprep.subr.bf16.mxu0 0
        %572 = vmatpush2.bf16.msra.mxu0 0
        %573 = vmatprep.subr.bf16.mxu0 0
        %574 = vmatpush2.bf16.msra.mxu0 0
        %575 = vmatprep.subr.bf16.mxu0 0
        %576 = vmatpush2.bf16.msra.mxu0 0
        %577 = vmatprep.mubr.bf16.mxu0 0
        %578 = vmatmul.mubr.bf16.gmra.mxu0 %v500
        %v579 = vpop.f32.mrf.mxu0
        %v580 = vadd.f32 %v496, %v579
        %v581 = vpop.f32.mrf.mxu0
        %v582 = vpop.f32.mrf.mxu0
        %v583 = vpop.f32.mrf.mxu0
        %584 = vdwg.mxu0
        %v585 = vmax.f32 %v580, 0.0
        %v586 = vpack.c.bf16 %v486, %v485
        %v587 = vpack.c.bf16 %v488, %v487
        %588 = vmatprep.subr.bf16.mxu0 0
        %589 = vmatpush1.bf16.msra.mxu0 0
        %590 = vmatprep.subr.bf16.mxu0 0
        %591 = vmatpush1.bf16.msra.mxu0 0
        %592 = vmatprep.subr.bf16.mxu0 0
        %593 = vmatpush1.bf16.msra.mxu0 0
        %594 = vmatprep.subr.bf16.mxu0 0
        %595 = vmatpush1.bf16.msra.mxu0 0
        %596 = vmatprep.subr.bf16.mxu0 0
        %597 = vmatpush1.bf16.msra.mxu0 0
        %598 = vmatprep.subr.bf16.mxu0 0
        %599 = vmatpush1.bf16.msra.mxu0 0
        %600 = vmatprep.subr.bf16.mxu0 0
        %601 = vmatpush1.bf16.msra.mxu0 %v587
        %602 = vmatprep.subr.bf16.mxu0 0
        %603 = vmatpush1.bf16.msra.mxu0 %v586
        %604 = vmatprep.subr.bf16.mxu0 0
        %605 = vmatpush2.bf16.msra.mxu0 0
        %606 = vmatprep.subr.bf16.mxu0 0
        %607 = vmatpush2.bf16.msra.mxu0 0
        %608 = vmatprep.subr.bf16.mxu0 0
        %609 = vmatpush2.bf16.msra.mxu0 0
        %610 = vmatprep.subr.bf16.mxu0 0
        %611 = vmatpush2.bf16.msra.mxu0 0
        %612 = vmatprep.subr.bf16.mxu0 0
        %613 = vmatpush2.bf16.msra.mxu0 0
        %614 = vmatprep.subr.bf16.mxu0 0
        %615 = vmatpush2.bf16.msra.mxu0 0
        %616 = vmatprep.subr.bf16.mxu0 0
        %617 = vmatpush2.bf16.msra.mxu0 0
        %618 = vmatprep.subr.bf16.mxu0 0
        %619 = vmatpush2.bf16.msra.mxu0 0
        %620 = vmatprep.mubr.bf16.mxu0 0
        %621 = vmatmul.mubr.bf16.gmra.mxu0 %v500
        %v622 = vpop.f32.mrf.mxu0
        %v623 = vadd.f32 %v496, %v622
        %v624 = vpop.f32.mrf.mxu0
        %v625 = vpop.f32.mrf.mxu0
        %v626 = vpop.f32.mrf.mxu0
        %627 = vdwg.mxu0
        %v628 = vmax.f32 %v623, 0.0
        %v629 = vlaneseq
        %v630 = vand.u32 %v629, 127
        %v631 = vstv %s476
        %v632 = vadd.s32 %v630, %v631
        %s633 = ssub.s32 %s476, 128
        %v634 = vstv %s633
        %v635 = vadd.s32 %v630, %v634
        %s636 = sadd.s32 %s476, 128
        %v637 = vstv %s636
        %v638 = vadd.s32 %v630, %v637
        %vm639 = vcmp.lt.s32.totalorder %v632, 192
        %v640 = vsel %vm639, 1, 0
        %vm641 = vcmp.eq.s32.totalorder %v640, 1
        %v642 = vsel %vm641, %v542, 0.0
        %v643 = vpack.c.bf16 %v642, %v642
        %vm644 = vcmp.ge.s32.totalorder %v635, 0
        %v645 = vsel %vm644, 1, 0
        %vm646 = vcmp.eq.s32.totalorder %v645, 1
        %v647 = vsel %vm646, %v585, 0.0
        %v648 = vpack.c.bf16 %v647, %v647
        %vm649 = vcmp.lt.s32.totalorder %v638, 192
        %v650 = vsel %vm649, 1, 0
        %vm651 = vcmp.eq.s32.totalorder %v650, 1
        %v652 = vsel %vm651, %v628, 0.0
        %v653 = vpack.c.bf16 %v652, %v652
        %v656 = vrot.slane %v648, 4
        %v657 = vrot.slane %v643, 4
        %658 = vrot.lane.b32.xlu0 %v656, 127
        %v659 = vpop.permute.xlu0 %658
        %660 = vrot.lane.b32.xlu0 %v657, 127
        %v661 = vpop.permute.xlu0 %660
        %vm662 = vcmask 1039360
        %v663 = vsel %vm662, %v659, %v661
        %664 = vrot.lane.b32.xlu0 %v648, 126
        %v665 = vpop.permute.xlu0 %664
        %666 = vrot.lane.b32.xlu0 %v643, 126
        %v667 = vpop.permute.xlu0 %666
        %vm668 = vcmask 1031168
        %v669 = vsel %vm668, %v665, %v667
        %670 = vrot.lane.b32.xlu0 %v656, 125
        %v671 = vpop.permute.xlu0 %670
        %672 = vrot.lane.b32.xlu0 %v657, 125
        %v673 = vpop.permute.xlu0 %672
        %vm674 = vcmask 1022976
        %v675 = vsel %vm674, %v671, %v673
        %676 = vrot.lane.b32.xlu0 %v648, 124
        %v677 = vpop.permute.xlu0 %676
        %678 = vrot.lane.b32.xlu0 %v643, 124
        %v679 = vpop.permute.xlu0 %678
        %vm680 = vcmask 1014784
        %v681 = vsel %vm680, %v677, %v679
        %682 = vrot.lane.b32.xlu0 %v656, 123
        %v683 = vpop.permute.xlu0 %682
        %684 = vrot.lane.b32.xlu0 %v657, 123
        %v685 = vpop.permute.xlu0 %684
        %vm686 = vcmask 1006592
        %v687 = vsel %vm686, %v683, %v685
        %688 = vrot.lane.b32.xlu0 %v648, 122
        %v689 = vpop.permute.xlu0 %688
        %690 = vrot.lane.b32.xlu0 %v643, 122
        %v691 = vpop.permute.xlu0 %690
        %vm692 = vcmask 998400
        %v693 = vsel %vm692, %v689, %v691
        %694 = vrot.lane.b32.xlu0 %v656, 121
        %v695 = vpop.permute.xlu0 %694
        %696 = vrot.lane.b32.xlu0 %v657, 121
        %v697 = vpop.permute.xlu0 %696
        %vm698 = vcmask 990208
        %v699 = vsel %vm698, %v695, %v697
        %700 = vrot.lane.b32.xlu0 %v648, 120
        %v701 = vpop.permute.xlu0 %700
        %702 = vrot.lane.b32.xlu0 %v643, 120
        %v703 = vpop.permute.xlu0 %702
        %vm704 = vcmask 982016
        %v705 = vsel %vm704, %v701, %v703
        %706 = vrot.lane.b32.xlu0 %v656, 119
        %v707 = vpop.permute.xlu0 %706
        %708 = vrot.lane.b32.xlu0 %v657, 119
        %v709 = vpop.permute.xlu0 %708
        %vm710 = vcmask 973824
        %v711 = vsel %vm710, %v707, %v709
        %712 = vrot.lane.b32.xlu0 %v648, 118
        %v713 = vpop.permute.xlu0 %712
        %714 = vrot.lane.b32.xlu0 %v643, 118
        %v715 = vpop.permute.xlu0 %714
        %vm716 = vcmask 965632
        %v717 = vsel %vm716, %v713, %v715
        %718 = vrot.lane.b32.xlu0 %v656, 117
        %v719 = vpop.permute.xlu0 %718
        %720 = vrot.lane.b32.xlu0 %v657, 117
        %v721 = vpop.permute.xlu0 %720
        %vm722 = vcmask 957440
        %v723 = vsel %vm722, %v719, %v721
        %724 = vrot.lane.b32.xlu0 %v643, 116
        %v725 = vpop.permute.xlu0 %724
        %v727 = vrot.slane %v653, 4
        %728 = vrot.lane.b32.xlu0 %v657, 115
        %v729 = vpop.permute.xlu0 %728
        %730 = vrot.lane.b32.xlu0 %v727, 115
        %v731 = vpop.permute.xlu0 %730
        %vm732 = vcmask 941056
        %v733 = vsel %vm732, %v729, %v731
        %734 = vrot.lane.b32.xlu0 %v643, 114
        %v735 = vpop.permute.xlu0 %734
        %736 = vrot.lane.b32.xlu0 %v653, 114
        %v737 = vpop.permute.xlu0 %736
        %vm738 = vcmask 932864
        %v739 = vsel %vm738, %v735, %v737
        %740 = vrot.lane.b32.xlu0 %v657, 113
        %v741 = vpop.permute.xlu0 %740
        %742 = vrot.lane.b32.xlu0 %v727, 113
        %v743 = vpop.permute.xlu0 %742
        %vm744 = vcmask 924672
        %v745 = vsel %vm744, %v741, %v743
        %vm746 = vcmask 1043456
        %v749 = vsel %vm746, %v648, %v663
        %v752 = vsel %vm746, %v643, %v661
        %v755 = vsel %vm746, %v669, %v675
        %v758 = vsel %vm746, %v667, %v673
        %v761 = vsel %vm746, %v681, %v687
        %v764 = vsel %vm746, %v679, %v685
        %v767 = vsel %vm746, %v693, %v699
        %v770 = vsel %vm746, %v691, %v697
        %v773 = vsel %vm746, %v705, %v711
        %v776 = vsel %vm746, %v703, %v709
        %v779 = vsel %vm746, %v717, %v723
        %v782 = vsel %vm746, %v715, %v721
        %v785 = vsel %vm746, %v725, %v729
        %v787 = vsel %vm746, %v725, %v733
        %v790 = vsel %vm746, %v735, %v741
        %v793 = vsel %vm746, %v739, %v745
        %794 = vrot.lane.b32.xlu0 %v727, 127
        %v795 = vpop.permute.xlu0 %794
        %v796 = vsel %vm662, %v661, %v795
        %797 = vrot.lane.b32.xlu0 %v653, 126
        %v798 = vpop.permute.xlu0 %797
        %v799 = vsel %vm668, %v667, %v798
        %800 = vrot.lane.b32.xlu0 %v727, 125
        %v801 = vpop.permute.xlu0 %800
        %v802 = vsel %vm674, %v673, %v801
        %803 = vrot.lane.b32.xlu0 %v653, 124
        %v804 = vpop.permute.xlu0 %803
        %v805 = vsel %vm680, %v679, %v804
        %806 = vrot.lane.b32.xlu0 %v727, 123
        %v807 = vpop.permute.xlu0 %806
        %v808 = vsel %vm686, %v685, %v807
        %809 = vrot.lane.b32.xlu0 %v653, 122
        %v810 = vpop.permute.xlu0 %809
        %v811 = vsel %vm692, %v691, %v810
        %812 = vrot.lane.b32.xlu0 %v727, 121
        %v813 = vpop.permute.xlu0 %812
        %v814 = vsel %vm698, %v697, %v813
        %815 = vrot.lane.b32.xlu0 %v653, 120
        %v816 = vpop.permute.xlu0 %815
        %v817 = vsel %vm704, %v703, %v816
        %v819 = vsel %vm746, %v643, %v796
        %v822 = vsel %vm746, %v653, %v795
        %v825 = vsel %vm746, %v799, %v802
        %v828 = vsel %vm746, %v798, %v801
        %v831 = vsel %vm746, %v805, %v808
        %v834 = vsel %vm746, %v804, %v807
        %v837 = vsel %vm746, %v811, %v814
        %v840 = vsel %vm746, %v810, %v813
        %849 = vrot.lane.b32.xlu0 %v819, 112
        %v850 = vpop.permute.xlu0 %849
        %851 = vrot.lane.b32.xlu0 %v822, 112
        %v852 = vpop.permute.xlu0 %851
        %853 = vrot.lane.b32.xlu0 %v825, 112
        %v854 = vpop.permute.xlu0 %853
        %855 = vrot.lane.b32.xlu0 %v828, 112
        %v856 = vpop.permute.xlu0 %855
        %857 = vrot.lane.b32.xlu0 %v831, 112
        %v858 = vpop.permute.xlu0 %857
        %859 = vrot.lane.b32.xlu0 %v834, 112
        %v860 = vpop.permute.xlu0 %859
        %861 = vrot.lane.b32.xlu0 %v837, 112
        %v862 = vpop.permute.xlu0 %861
        %863 = vrot.lane.b32.xlu0 %v840, 112
        %v864 = vpop.permute.xlu0 %863
        %865 = vrot.lane.b32.xlu0 %v817, 112
        %v866 = vpop.permute.xlu0 %865
        %867 = vrot.lane.b32.xlu0 %v816, 112
        %v868 = vpop.permute.xlu0 %867
        %vm869 = vcmask 916480
        %v870 = vsel %vm869, %v850, %v852
        %v871 = vsel %vm869, %v854, %v856
        %v872 = vsel %vm869, %v858, %v860
        %v873 = vsel %vm869, %v862, %v864
        %v874 = vsel %vm869, %v866, %v868
        %v875 = vld [vmem:[%s4] sm:$0xff]
        %v876 = vld [vmem:[%s7] sm:$0xff]
        %878 = vset.pattern.permute.xlu0 0
        %879 = vperm.xlu0 %878, %v876
        %v880 = vpop.permute.xlu0 %879
        %v883 = vunpack.c.l.b16 %v875
        %v884 = vunpack.c.h.b16 %v875
        %v885 = vpack.c.b16 %v883, %v883
        %v886 = vpack.c.b16 %v884, %v884
        %904 = vrot.lane.b32.xlu0 %v749, 12
        %v905 = vpop.permute.xlu0 %904
        %906 = vrot.lane.b32.xlu0 %v752, 12
        %v907 = vpop.permute.xlu0 %906
        %908 = vrot.lane.b32.xlu0 %v755, 12
        %v909 = vpop.permute.xlu0 %908
        %910 = vrot.lane.b32.xlu0 %v758, 12
        %v911 = vpop.permute.xlu0 %910
        %912 = vrot.lane.b32.xlu0 %v761, 12
        %v913 = vpop.permute.xlu0 %912
        %914 = vrot.lane.b32.xlu0 %v764, 12
        %v915 = vpop.permute.xlu0 %914
        %916 = vrot.lane.b32.xlu0 %v767, 12
        %v917 = vpop.permute.xlu0 %916
        %918 = vrot.lane.b32.xlu0 %v770, 12
        %v919 = vpop.permute.xlu0 %918
        %920 = vrot.lane.b32.xlu0 %v773, 12
        %v921 = vpop.permute.xlu0 %920
        %922 = vrot.lane.b32.xlu0 %v776, 12
        %v923 = vpop.permute.xlu0 %922
        %924 = vrot.lane.b32.xlu0 %v779, 12
        %v925 = vpop.permute.xlu0 %924
        %926 = vrot.lane.b32.xlu0 %v782, 12
        %v927 = vpop.permute.xlu0 %926
        %928 = vrot.lane.b32.xlu0 %v785, 12
        %v929 = vpop.permute.xlu0 %928
        %930 = vrot.lane.b32.xlu0 %v787, 12
        %v931 = vpop.permute.xlu0 %930
        %932 = vrot.lane.b32.xlu0 %v790, 12
        %v933 = vpop.permute.xlu0 %932
        %934 = vrot.lane.b32.xlu0 %v793, 12
        %v935 = vpop.permute.xlu0 %934
        %936 = vrot.lane.b32.xlu0 %v850, 12
        %v937 = vpop.permute.xlu0 %936
        %938 = vrot.lane.b32.xlu0 %v870, 12
        %v939 = vpop.permute.xlu0 %938
        %940 = vrot.lane.b32.xlu0 %v854, 12
        %v941 = vpop.permute.xlu0 %940
        %942 = vrot.lane.b32.xlu0 %v871, 12
        %v943 = vpop.permute.xlu0 %942
        %944 = vrot.lane.b32.xlu0 %v858, 12
        %v945 = vpop.permute.xlu0 %944
        %946 = vrot.lane.b32.xlu0 %v872, 12
        %v947 = vpop.permute.xlu0 %946
        %948 = vrot.lane.b32.xlu0 %v862, 12
        %v949 = vpop.permute.xlu0 %948
        %950 = vrot.lane.b32.xlu0 %v873, 12
        %v951 = vpop.permute.xlu0 %950
        %952 = vrot.lane.b32.xlu0 %v866, 12
        %v953 = vpop.permute.xlu0 %952
        %954 = vrot.lane.b32.xlu0 %v874, 12
        %v955 = vpop.permute.xlu0 %954
        %vm956 = vcmask 97280
        %v957 = vsel %vm956, %v905, %v907
        %v958 = vsel %vm956, %v909, %v911
        %v959 = vsel %vm956, %v913, %v915
        %v960 = vsel %vm956, %v917, %v919
        %v961 = vsel %vm956, %v921, %v923
        %v962 = vsel %vm956, %v925, %v927
        %v963 = vsel %vm956, %v929, %v931
        %v964 = vsel %vm956, %v933, %v935
        %v965 = vsel %vm956, %v937, %v939
        %v966 = vsel %vm956, %v941, %v943
        %v967 = vsel %vm956, %v945, %v947
        %v968 = vsel %vm956, %v949, %v951
        %v969 = vsel %vm956, %v953, %v955
        %vm982 = vcmask 588800
        %v984 = vsel %vm982, %v886, 0
        %v987 = vsel %vm746, %v969, 0
        %989 = vmatprep.subr.bf16.mxu0 0
        %990 = vmatpush1.bf16.msra.mxu0 %v964
        %991 = vmatprep.subr.bf16.mxu0 0
        %992 = vmatpush1.bf16.msra.mxu0 %v963
        %993 = vmatprep.subr.bf16.mxu0 0
        %994 = vmatpush1.bf16.msra.mxu0 %v962
        %995 = vmatprep.subr.bf16.mxu0 0
        %996 = vmatpush1.bf16.msra.mxu0 %v961
        %997 = vmatprep.subr.bf16.mxu0 0
        %998 = vmatpush1.bf16.msra.mxu0 %v960
        %999 = vmatprep.subr.bf16.mxu0 0
        %1000 = vmatpush1.bf16.msra.mxu0 %v959
        %1001 = vmatprep.subr.bf16.mxu0 0
        %1002 = vmatpush1.bf16.msra.mxu0 %v958
        %1003 = vmatprep.subr.bf16.mxu0 0
        %1004 = vmatpush1.bf16.msra.mxu0 %v957
        %1005 = vmatprep.subr.bf16.mxu0 0
        %1006 = vmatpush2.bf16.msra.mxu0 0
        %1007 = vmatprep.subr.bf16.mxu0 0
        %1008 = vmatpush2.bf16.msra.mxu0 0
        %1009 = vmatprep.subr.bf16.mxu0 0
        %1010 = vmatpush2.bf16.msra.mxu0 0
        %1011 = vmatprep.subr.bf16.mxu0 0
        %1012 = vmatpush2.bf16.msra.mxu0 %v987
        %1013 = vmatprep.subr.bf16.mxu0 0
        %1014 = vmatpush2.bf16.msra.mxu0 %v968
        %1015 = vmatprep.subr.bf16.mxu0 0
        %1016 = vmatpush2.bf16.msra.mxu0 %v967
        %1017 = vmatprep.subr.bf16.mxu0 0
        %1018 = vmatpush2.bf16.msra.mxu0 %v966
        %1019 = vmatprep.subr.bf16.mxu0 0
        %1020 = vmatpush2.bf16.msra.mxu0 %v965
        %1021 = vmatprep.mubr.bf16.mxu0 %v984
        %1022 = vmatmul.mubr.bf16.gmra.mxu0 %v885
        %v1023 = vpop.f32.mrf.mxu0
        %v1024 = vadd.f32 %v880, %v1023
        %v1025 = vpop.f32.mrf.mxu0
        %v1026 = vpop.f32.mrf.mxu0
        %v1027 = vpop.f32.mrf.mxu0
        %1028 = vdwg.mxu0
        %v1029 = vmax.f32 %v1024, 0.0
        %v1030 = vpack.c.bf16 %v1029, %v1029
        %v1031 = vld [vmem:[%s5] sm:$0xf]
        %v1032 = vld [vmem:[%s5 + $0x4] sm:$0xf]
        %v1033 = vld [vmem:[%s5 + $0x8] sm:$0xf]
        %v1034 = vld [vmem:[%s5 + $0xc] sm:$0xf]
        %v1035 = vld [vmem:[%s8] sm:$0xff]
        %v1036 = vld [vmem:[%s8 + $0x8] sm:$0xff]
        %v1037 = vld [vmem:[%s8 + $0x10] sm:$0xff]
        %v1038 = vld [vmem:[%s8 + $0x18] sm:$0xff]
        %1040 = vset.pattern.permute.xlu0 0
        %1041 = vperm.xlu0 %1040, %v1035
        %v1042 = vpop.permute.xlu0 %1041
        %1045 = vset.pattern.permute.xlu0 0
        %1046 = vperm.xlu0 %1045, %v1036
        %v1047 = vpop.permute.xlu0 %1046
        %1050 = vset.pattern.permute.xlu0 0
        %1051 = vperm.xlu0 %1050, %v1037
        %v1052 = vpop.permute.xlu0 %1051
        %1055 = vset.pattern.permute.xlu0 0
        %1056 = vperm.xlu0 %1055, %v1038
        %v1057 = vpop.permute.xlu0 %1056
        %v1063 = vunpack.c.l.b16 %v1031
        %v1064 = vunpack.c.l.b16 %v1032
        %v1065 = vunpack.c.l.b16 %v1033
        %v1066 = vunpack.c.l.b16 %v1034
        %v1067 = vpack.c.b16 %v1064, %v1063
        %v1068 = vpack.c.b16 %v1066, %v1065
        %vm1069 = vcmask 64512
        %v1071 = vsel %vm1069, %v1067, 0
        %v1074 = vsel %vm1069, %v1068, 0
        %v1077 = vsel %vm746, %v1030, 0
        %1079 = vmatprep.subr.bf16.mxu0 0
        %1080 = vmatpush1.bf16.msra.mxu0 0
        %1081 = vmatprep.subr.bf16.mxu0 0
        %1082 = vmatpush1.bf16.msra.mxu0 0
        %1083 = vmatprep.subr.bf16.mxu0 0
        %1084 = vmatpush1.bf16.msra.mxu0 0
        %1085 = vmatprep.subr.bf16.mxu0 0
        %1086 = vmatpush1.bf16.msra.mxu0 0
        %1087 = vmatprep.subr.bf16.mxu0 0
        %1088 = vmatpush1.bf16.msra.mxu0 0
        %1089 = vmatprep.subr.bf16.mxu0 0
        %1090 = vmatpush1.bf16.msra.mxu0 0
        %1091 = vmatprep.subr.bf16.mxu0 0
        %1092 = vmatpush1.bf16.msra.mxu0 0
        %1093 = vmatprep.subr.bf16.mxu0 0
        %1094 = vmatpush1.bf16.msra.mxu0 %v1077
        %1095 = vmatprep.subr.bf16.mxu0 0
        %1096 = vmatpush2.bf16.msra.mxu0 0
        %1097 = vmatprep.subr.bf16.mxu0 0
        %1098 = vmatpush2.bf16.msra.mxu0 0
        %1099 = vmatprep.subr.bf16.mxu0 0
        %1100 = vmatpush2.bf16.msra.mxu0 0
        %1101 = vmatprep.subr.bf16.mxu0 0
        %1102 = vmatpush2.bf16.msra.mxu0 0
        %1103 = vmatprep.subr.bf16.mxu0 0
        %1104 = vmatpush2.bf16.msra.mxu0 0
        %1105 = vmatprep.subr.bf16.mxu0 0
        %1106 = vmatpush2.bf16.msra.mxu0 0
        %1107 = vmatprep.subr.bf16.mxu0 0
        %1108 = vmatpush2.bf16.msra.mxu0 0
        %1109 = vmatprep.subr.bf16.mxu0 0
        %1110 = vmatpush2.bf16.msra.mxu0 0
        %1111 = vmatprep.mubr.bf16.mxu0 0
        %1112 = vmatmul.mubr.bf16.gmra.mxu0 %v1071
        %v1113 = vpop.f32.mrf.mxu0
        %v1114 = vadd.f32 %v1042, %v1113
        %v1115 = vpop.f32.mrf.mxu0
        %v1116 = vpop.f32.mrf.mxu0
        %v1117 = vadd.f32 %v1047, %v1116
        %v1118 = vpop.f32.mrf.mxu0
        %1119 = vmatprep.mubr.bf16.mxu0 0
        %1120 = vmatmul.mubr.bf16.gmra.mxu0 %v1074
        %v1121 = vpop.f32.mrf.mxu0
        %v1122 = vadd.f32 %v1052, %v1121
        %v1123 = vpop.f32.mrf.mxu0
        %v1124 = vpop.f32.mrf.mxu0
        %v1125 = vadd.f32 %v1057, %v1124
        %v1126 = vpop.f32.mrf.mxu0
        %1127 = vdwg.mxu0
        %v1128 = vadd.f32 %v1114, %v477
        %v1129 = vadd.f32 %v1117, %v478
        %v1130 = vadd.f32 %v1122, %v479
        %v1131 = vadd.f32 %v1125, %v480
        %v1132 = vmax.f32 %v1128, 0.0
        %v1133 = vmax.f32 %v1129, 0.0
        %v1134 = vmax.f32 %v1130, 0.0
        %v1135 = vmax.f32 %v1131, 0.0
        %1136 = vst [vmem:[%s468] sm:$0xff] %v1132
        %1137 = vst [vmem:[%s468 + $0x8] sm:$0xff] %v1133
        %1138 = vst [vmem:[%s468 + $0x10] sm:$0xff] %v1134
        %1139 = vst [vmem:[%s468 + $0x18] sm:$0xff] %v1135
        %s1140 = sand.u32 %s273, 1
        %s1141 = scalar_lea.sflag [#allocation4], %s1140
        %s1142 = sand.u32 %s273, 1
        %s1143 = smul.addr %s1142, 32
        %s1144 = scalar_lea.vmem [#allocation8], %s1143
        // Predicated region
        $region69: #{tpu_custom_call.1} parent=55 // pred_check
          %p1145 = pneg %p283
        $region70: #{tpu_custom_call.1} parent=55 // pred_check_branch
          %1147 = sbr.rel (%p1145) target = $region72
        $region71: #{tpu_custom_call.1} parent=55 // pred_region
          %s1149 = ssub.s32 512, 512
          %1150 = vsyncadd %s1141, %s1149
          %s1151 = smul.addr %s33, 8
          %s1152 = sadd.s32 %s34, %s1151
          %s1153 = smul.addr %s1152, 128
          %s1154 = scalar_lea.hbm %s9, %s1153
          %s1155 = sshll.u32 %s1144, 4
          %s1156 = int_to_ptr.vmem [resolvable:$true] %s1155
          %1161 = dma.vmem_to_hbm [thread:$0]  %s1156, 512, %s1154, %s1141, 128, 256, 8
        $region72: #{tpu_custom_call.1} parent=55 // pred_fallthru
          _
      $region56: #{tpu_custom_call.1} parent=5 // pred_fallthru
        _
      %p1162 = scmp.le.s32.totalorder 2, %s24
      // Predicated region
      $region73: #{tpu_custom_call.1} parent=5 // pred_check
        %p1163 = pneg %p1162
      $region74: #{tpu_custom_call.1} parent=5 // pred_check_branch
        %1165 = sbr.rel (%p1163) target = $region76
      $region75: #{tpu_custom_call.1} parent=5 // pred_region
        %s1166 = ssub.s32 %s24, 2
        // Predicated region
        $region77: #{tpu_custom_call.1} parent=75 // pred_check
          %p1167 = pneg %p289
        $region78: #{tpu_custom_call.1} parent=75 // pred_check_branch
          %1169 = sbr.rel (%p1167) target = $region80
        $region79: #{tpu_custom_call.1} parent=75 // pred_region
          %s1170 = sand.u32 %s274, 1
          %s1171 = scalar_lea.sflag [#allocation4], %s1170
          %s1172 = sand.u32 %s274, 1
          %s1173 = smul.addr %s1172, 32
          %s1174 = scalar_lea.vmem [#allocation8], %s1173
          %1175 = dma.done %s1171, 512
        $region80: #{tpu_custom_call.1} parent=75 // pred_fallthru
          _
      $region76: #{tpu_custom_call.1} parent=5 // pred_fallthru
        _
    $region6: #{tpu_custom_call.1} parent=1 // loop_footer
      %s28 = sadd.s32 1, %s24
    $region7: #{tpu_custom_call.1} parent=1 // loop_footer_branch
      %23 = sbr.rel target = $region3
    $region8: #{tpu_custom_call.1} parent=1 // loop_exit
      _
    %1176 = vsyncpa [#allocation3], 1
    %s1177 = scalar_lea.sflag [#allocation3], 1
    %1178 = vsyncpa %s1177, 1
    %1179 = vsyncpa [#allocation6], 1
    %s1180 = scalar_lea.sflag [#allocation6], 1
    %1181 = vsyncpa %s1180, 1
    %1182 = vsyncpa [#allocation4], 1
    %s1183 = scalar_lea.sflag [#allocation4], 1
    %1184 = vsyncpa %s1183, 1

// kernel: tpu_custom_call.1
$region0: #{tpu_custom_call.1}
  #allocation0 [shape = 'u32[]', space=smem, size = 0x4, offset = 0x4, fixed_abs, tag = 'smem constant byte address 0x4 - core index']
  #allocation1 [shape = 'u32[144,128]{1,0:T(1,128)}', space=vmem, size = 0x12000, scoped, tag = 'internal scratch']
  %s0 = inlined_call_operand.hbm [shape: f32[2,32,192], index: 0, kind: input, shape index: {}]
  %s1 = inlined_call_operand.hbm [shape: f32[2,32,192], index: 1, kind: input, shape index: {}]
  %s2 = inlined_call_operand.hbm [shape: f32[2,32,192], index: 2, kind: input, shape index: {}]
  %s3 = inlined_call_operand.vmem [shape: bf16[8,32], index: 3, kind: input, shape index: {}]
  %s4 = inlined_call_operand.vmem [shape: bf16[8,200], index: 4, kind: input, shape index: {}]
  %s5 = inlined_call_operand.vmem [shape: bf16[32,8], index: 5, kind: input, shape index: {}]
  %s6 = inlined_call_operand.vmem [shape: f32[8,1], index: 6, kind: input, shape index: {}]
  %s7 = inlined_call_operand.vmem [shape: f32[8,1], index: 7, kind: input, shape index: {}]
  %s8 = inlined_call_operand.vmem [shape: f32[32,1], index: 8, kind: input, shape index: {}]
  %s9 = inlined_call_operand.hbm [shape: f32[2,32,192], index: 9, kind: output, shape index: {}]
  %s10 = sld [smem:[#allocation0]]
  $region81: #{tpu_custom_call.1} parent=0
    _
  %s12 = ssub.s32 1, %s10
  %s13 = scalar_select 0, %s12, %s10
  $region1: #{tpu_custom_call.1} parent=0
    #allocation2 [shape = 'u8[32768]{0}', space=vmem, size = 0x8000, scoped, tag = 'input window, operand 0']
    #allocation3 [shape = 's32[2]{0}', space=sflag, size = 0x8, scoped, tag = 'scoped memory for tpu_custom_call.1']
    #allocation4 [shape = 's32[2]{0}', space=sflag, size = 0x8, scoped, tag = 'scoped memory for tpu_custom_call.1']
    #allocation5 [shape = 'u8[32768]{0}', space=vmem, size = 0x8000, scoped, tag = 'input window, operand 1']
    #allocation6 [shape = 's32[2]{0}', space=sflag, size = 0x8, scoped, tag = 'scoped memory for tpu_custom_call.1']
    #allocation7 [shape = 'u8[32768]{0}', space=vmem, size = 0x8000, scoped, tag = 'input window, operand 2']
    #allocation8 [shape = 'u8[32768]{0}', space=vmem, size = 0x8000, scoped, tag = 'output window, operand 0']
    %14 = vsyncpa [#allocation3], 0
    %s15 = scalar_lea.sflag [#allocation3], 1
    %16 = vsyncpa %s15, 0
    %17 = vsyncpa [#allocation6], 0
    %s18 = scalar_lea.sflag [#allocation6], 1
    %19 = vsyncpa %s18, 0
    %20 = vsyncpa [#allocation4], 0
    %s21 = scalar_lea.sflag [#allocation4], 1
    %22 = vsyncpa %s21, 0
    loop: start=0, step=1, limit=6
    $region2: #{tpu_custom_call.1} parent=1 // loop_pre_header
      _
    $region3: #{tpu_custom_call.1} parent=1 // loop_header
      %s24 = sphi 0, %s28
      %p25 = scmp.ge.s32.totalorder %s24, 6
      %s31 = sphi 0, %s43
      %s32 = sphi 0, %s39
      %s33 = sphi 0, %s31
      %s34 = sphi 0, %s32
      %s35 = sphi 0, %s33
      %s36 = sphi 0, %s34
      %s48 = sphi 0, %s50
      %s51 = sphi 0, %s48
      %s52 = sphi 0, %s51
      %s68 = sphi 0, %s52
      %s82 = sphi 0, %s84
      %s85 = sphi 0, %s82
      %s86 = sphi 0, %s85
      %s102 = sphi 0, %s86
      %s116 = sphi 0, %s118
      %s119 = sphi 0, %s116
      %s120 = sphi 0, %s119
      %s136 = sphi 0, %s120
      %s140 = sphi 0, %s140
      %s142 = sphi 0, %s140
      %s143 = sphi 0, %s142
      %s157 = sphi 0, %s143
      %s161 = sphi 0, %s161
      %s163 = sphi 0, %s161
      %s164 = sphi 0, %s163
      %s178 = sphi 0, %s164
      %s182 = sphi 0, %s182
      %s184 = sphi 0, %s182
      %s185 = sphi 0, %s184
      %s199 = sphi 0, %s185
      %s203 = sphi 0, %s203
      %s205 = sphi 0, %s203
      %s206 = sphi 0, %s205
      %s220 = sphi 0, %s206
      %s224 = sphi 0, %s224
      %s226 = sphi 0, %s224
      %s227 = sphi 0, %s226
      %s241 = sphi 0, %s227
      %s245 = sphi 0, %s245
      %s247 = sphi 0, %s245
      %s248 = sphi 0, %s247
      %s262 = sphi 0, %s248
      %s270 = sphi 0, %s272
      %s273 = sphi 0, %s270
      %s274 = sphi 0, %s273
      %s290 = sphi 0, %s274
    $region4: #{tpu_custom_call.1} parent=1 // loop_header_branch
      %27 = sbr.rel (%p25) target = $region8
    $region5: #{tpu_custom_call.1} parent=1 // loop_body
      %s29 = ssub.s32 %s24, 1
      %s30 = ssub.s32 %s24, 2
      %s37 = sadd.s32 1, %s32
      %p38 = scmp.ge.s32.totalorder %s37, 2
      %s39 = scalar_select %p38, 0, %s37
      %s40 = sadd.s32 1, %s31
      %s41 = scalar_select %p38, %s40, %s31
      %p42 = scmp.ge.s32.totalorder %s41, 2
      %s43 = scalar_select %p42, 0, %s41
      %s44 = ssub.s32 %s31, %s43
      %s45 = ssub.s32 %s32, %s39
      %s46 = sor.u32 %s44, %s45
      %p47 = scmp.eq.s32.totalorder %s46, 0
      %s49 = sadd.s32 %s48, 1
      %s50 = scalar_select %p47, %s48, %s49
      %p53 = pneg %p47
      %p54 = scmp.eq.s32.totalorder %s24, 3
      %p55 = por %p53, %p54
      %p56 = scmp.ne.s32.totalorder %s48, %s51
      %p57 = scmp.eq.s32.totalorder %s24, 0
      %p58 = por %p56, %p57
      %p59 = scmp.ne.s32.totalorder %s48, %s51
      %p60 = scmp.eq.s32.totalorder %s29, 3
      %p61 = por %p59, %p60
      %p62 = scmp.ne.s32.totalorder %s51, %s52
      %p63 = scmp.eq.s32.totalorder %s29, 0
      %p64 = por %p62, %p63
      %p65 = scmp.ne.s32.totalorder %s51, %s52
      %p66 = scmp.eq.s32.totalorder %s30, 3
      %p67 = por %p65, %p66
      %p69 = scmp.ne.s32.totalorder %s52, %s68
      %p70 = scmp.eq.s32.totalorder %s30, 0
      %p71 = por %p69, %p70
      %s72 = ssub.s32 %s32, 1
      %p73 = scmp.gt.s32.totalorder %s72, 0
      %s74 = scalar_select %p73, %s72, 0
      %s75 = ssub.s32 %s39, 1
      %p76 = scmp.gt.s32.totalorder %s75, 0
      %s77 = scalar_select %p76, %s75, 0
      %s78 = ssub.s32 %s31, %s43
      %s79 = ssub.s32 %s74, %s77
      %s80 = sor.u32 %s78, %s79
      %p81 = scmp.eq.s32.totalorder %s80, 0
      %s83 = sadd.s32 %s82, 1
      %s84 = scalar_select %p81, %s82, %s83
      %p87 = pneg %p81
      %p88 = scmp.eq.s32.totalorder %s24, 3
      %p89 = por %p87, %p88
      %p90 = scmp.ne.s32.totalorder %s82, %s85
      %p91 = scmp.eq.s32.totalorder %s24, 0
      %p92 = por %p90, %p91
      %p93 = scmp.ne.s32.totalorder %s82, %s85
      %p94 = scmp.eq.s32.totalorder %s29, 3
      %p95 = por %p93, %p94
      %p96 = scmp.ne.s32.totalorder %s85, %s86
      %p97 = scmp.eq.s32.totalorder %s29, 0
      %p98 = por %p96, %p97
      %p99 = scmp.ne.s32.totalorder %s85, %s86
      %p100 = scmp.eq.s32.totalorder %s30, 3
      %p101 = por %p99, %p100
      %p103 = scmp.ne.s32.totalorder %s86, %s102
      %p104 = scmp.eq.s32.totalorder %s30, 0
      %p105 = por %p103, %p104
      %s106 = sadd.s32 %s32, 1
      %p107 = scmp.lt.s32.totalorder %s106, 1
      %s108 = scalar_select %p107, %s106, 1
      %s109 = sadd.s32 %s39, 1
      %p110 = scmp.lt.s32.totalorder %s109, 1
      %s111 = scalar_select %p110, %s109, 1
      %s112 = ssub.s32 %s31, %s43
      %s113 = ssub.s32 %s108, %s111
      %s114 = sor.u32 %s112, %s113
      %p115 = scmp.eq.s32.totalorder %s114, 0
      %s117 = sadd.s32 %s116, 1
      %s118 = scalar_select %p115, %s116, %s117
      %p121 = pneg %p115
      %p122 = scmp.eq.s32.totalorder %s24, 3
      %p123 = por %p121, %p122
      %p124 = scmp.ne.s32.totalorder %s116, %s119
      %p125 = scmp.eq.s32.totalorder %s24, 0
      %p126 = por %p124, %p125
      %p127 = scmp.ne.s32.totalorder %s116, %s119
      %p128 = scmp.eq.s32.totalorder %s29, 3
      %p129 = por %p127, %p128
      %p130 = scmp.ne.s32.totalorder %s119, %s120
      %p131 = scmp.eq.s32.totalorder %s29, 0
      %p132 = por %p130, %p131
      %p133 = scmp.ne.s32.totalorder %s119, %s120
      %p134 = scmp.eq.s32.totalorder %s30, 3
      %p135 = por %p133, %p134
      %p137 = scmp.ne.s32.totalorder %s120, %s136
      %p138 = scmp.eq.s32.totalorder %s30, 0
      %p139 = por %p137, %p138
      %s141 = sadd.s32 %s140, 1
      %p144 = scmp.eq.s32.totalorder %s24, 3
      %p145 = scmp.ne.s32.totalorder %s140, %s142
      %p146 = scmp.eq.s32.totalorder %s24, 0
      %p147 = por %p145, %p146
      %p148 = scmp.ne.s32.totalorder %s140, %s142
      %p149 = scmp.eq.s32.totalorder %s29, 3
      %p150 = por %p148, %p149
      %p151 = scmp.ne.s32.totalorder %s142, %s143
      %p152 = scmp.eq.s32.totalorder %s29, 0
      %p153 = por %p151, %p152
      %p154 = scmp.ne.s32.totalorder %s142, %s143
      %p155 = scmp.eq.s32.totalorder %s30, 3
      %p156 = por %p154, %p155
      %p158 = scmp.ne.s32.totalorder %s143, %s157
      %p159 = scmp.eq.s32.totalorder %s30, 0
      %p160 = por %p158, %p159
      %s162 = sadd.s32 %s161, 1
      %p165 = scmp.eq.s32.totalorder %s24, 3
      %p166 = scmp.ne.s32.totalorder %s161, %s163
      %p167 = scmp.eq.s32.totalorder %s24, 0
      %p168 = por %p166, %p167
      %p169 = scmp.ne.s32.totalorder %s161, %s163
      %p170 = scmp.eq.s32.totalorder %s29, 3
      %p171 = por %p169, %p170
      %p172 = scmp.ne.s32.totalorder %s163, %s164
      %p173 = scmp.eq.s32.totalorder %s29, 0
      %p174 = por %p172, %p173
      %p175 = scmp.ne.s32.totalorder %s163, %s164
      %p176 = scmp.eq.s32.totalorder %s30, 3
      %p177 = por %p175, %p176
      %p179 = scmp.ne.s32.totalorder %s164, %s178
      %p180 = scmp.eq.s32.totalorder %s30, 0
      %p181 = por %p179, %p180
      %s183 = sadd.s32 %s182, 1
      %p186 = scmp.eq.s32.totalorder %s24, 3
      %p187 = scmp.ne.s32.totalorder %s182, %s184
      %p188 = scmp.eq.s32.totalorder %s24, 0
      %p189 = por %p187, %p188
      %p190 = scmp.ne.s32.totalorder %s182, %s184
      %p191 = scmp.eq.s32.totalorder %s29, 3
      %p192 = por %p190, %p191
      %p193 = scmp.ne.s32.totalorder %s184, %s185
      %p194 = scmp.eq.s32.totalorder %s29, 0
      %p195 = por %p193, %p194
      %p196 = scmp.ne.s32.totalorder %s184, %s185
      %p197 = scmp.eq.s32.totalorder %s30, 3
      %p198 = por %p196, %p197
      %p200 = scmp.ne.s32.totalorder %s185, %s199
      %p201 = scmp.eq.s32.totalorder %s30, 0
      %p202 = por %p200, %p201
      %s204 = sadd.s32 %s203, 1
      %p207 = scmp.eq.s32.totalorder %s24, 3
      %p208 = scmp.ne.s32.totalorder %s203, %s205
      %p209 = scmp.eq.s32.totalorder %s24, 0
      %p210 = por %p208, %p209
      %p211 = scmp.ne.s32.totalorder %s203, %s205
      %p212 = scmp.eq.s32.totalorder %s29, 3
      %p213 = por %p211, %p212
      %p214 = scmp.ne.s32.totalorder %s205, %s206
      %p215 = scmp.eq.s32.totalorder %s29, 0
      %p216 = por %p214, %p215
      %p217 = scmp.ne.s32.totalorder %s205, %s206
      %p218 = scmp.eq.s32.totalorder %s30, 3
      %p219 = por %p217, %p218
      %p221 = scmp.ne.s32.totalorder %s206, %s220
      %p222 = scmp.eq.s32.totalorder %s30, 0
      %p223 = por %p221, %p222
      %s225 = sadd.s32 %s224, 1
      %p228 = scmp.eq.s32.totalorder %s24, 3
      %p229 = scmp.ne.s32.totalorder %s224, %s226
      %p230 = scmp.eq.s32.totalorder %s24, 0
      %p231 = por %p229, %p230
      %p232 = scmp.ne.s32.totalorder %s224, %s226
      %p233 = scmp.eq.s32.totalorder %s29, 3
      %p234 = por %p232, %p233
      %p235 = scmp.ne.s32.totalorder %s226, %s227
      %p236 = scmp.eq.s32.totalorder %s29, 0
      %p237 = por %p235, %p236
      %p238 = scmp.ne.s32.totalorder %s226, %s227
      %p239 = scmp.eq.s32.totalorder %s30, 3
      %p240 = por %p238, %p239
      %p242 = scmp.ne.s32.totalorder %s227, %s241
      %p243 = scmp.eq.s32.totalorder %s30, 0
      %p244 = por %p242, %p243
      %s246 = sadd.s32 %s245, 1
      %p249 = scmp.eq.s32.totalorder %s24, 3
      %p250 = scmp.ne.s32.totalorder %s245, %s247
      %p251 = scmp.eq.s32.totalorder %s24, 0
      %p252 = por %p250, %p251
      %p253 = scmp.ne.s32.totalorder %s245, %s247
      %p254 = scmp.eq.s32.totalorder %s29, 3
      %p255 = por %p253, %p254
      %p256 = scmp.ne.s32.totalorder %s247, %s248
      %p257 = scmp.eq.s32.totalorder %s29, 0
      %p258 = por %p256, %p257
      %p259 = scmp.ne.s32.totalorder %s247, %s248
      %p260 = scmp.eq.s32.totalorder %s30, 3
      %p261 = por %p259, %p260
      %p263 = scmp.ne.s32.totalorder %s248, %s262
      %p264 = scmp.eq.s32.totalorder %s30, 0
      %p265 = por %p263, %p264
      %s266 = ssub.s32 %s31, %s43
      %s267 = ssub.s32 %s32, %s39
      %s268 = sor.u32 %s266, %s267
      %p269 = scmp.eq.s32.totalorder %s268, 0
      %s271 = sadd.s32 %s270, 1
      %s272 = scalar_select %p269, %s270, %s271
      %p275 = pneg %p269
      %p276 = scmp.eq.s32.totalorder %s24, 3
      %p277 = por %p275, %p276
      %p278 = scmp.ne.s32.totalorder %s270, %s273
      %p279 = scmp.eq.s32.totalorder %s24, 0
      %p280 = por %p278, %p279
      %p281 = scmp.ne.s32.totalorder %s270, %s273
      %p282 = scmp.eq.s32.totalorder %s29, 3
      %p283 = por %p281, %p282
      %p284 = scmp.ne.s32.totalorder %s273, %s274
      %p285 = scmp.eq.s32.totalorder %s29, 0
      %p286 = por %p284, %p285
      %p287 = scmp.ne.s32.totalorder %s273, %s274
      %p288 = scmp.eq.s32.totalorder %s30, 3
      %p289 = por %p287, %p288
      %p291 = scmp.ne.s32.totalorder %s274, %s290
      %p292 = scmp.eq.s32.totalorder %s30, 0
      %p293 = por %p291, %p292
      %p294 = scmp.le.s32.totalorder 1, %s24
      %p295 = scmp.lt.s32.totalorder %s24, 5
      %p296 = pnand %p294, %p295
      %p297 = pneg %p296
      // Predicated region
      $region9: #{tpu_custom_call.1} parent=5 // pred_check
        _
      $region10: #{tpu_custom_call.1} parent=5 // pred_check_branch
        %299 = sbr.rel (%p296) target = $region12
      $region11: #{tpu_custom_call.1} parent=5 // pred_region
        %s300 = ssub.s32 %s24, 1
        // Predicated region
        $region13: #{tpu_custom_call.1} parent=11 // pred_check
          %p301 = pneg %p153
        $region14: #{tpu_custom_call.1} parent=11 // pred_check_branch
          %303 = sbr.rel (%p301) target = $region16
        $region15: #{tpu_custom_call.1} parent=11 // pred_region
          _
        $region16: #{tpu_custom_call.1} parent=11 // pred_fallthru
          _
        // Predicated region
        $region17: #{tpu_custom_call.1} parent=11 // pred_check
          %p304 = pneg %p174
        $region18: #{tpu_custom_call.1} parent=11 // pred_check_branch
          %306 = sbr.rel (%p304) target = $region20
        $region19: #{tpu_custom_call.1} parent=11 // pred_region
          _
        $region20: #{tpu_custom_call.1} parent=11 // pred_fallthru
          _
        // Predicated region
        $region21: #{tpu_custom_call.1} parent=11 // pred_check
          %p307 = pneg %p195
        $region22: #{tpu_custom_call.1} parent=11 // pred_check_branch
          %309 = sbr.rel (%p307) target = $region24
        $region23: #{tpu_custom_call.1} parent=11 // pred_region
          _
        $region24: #{tpu_custom_call.1} parent=11 // pred_fallthru
          _
        // Predicated region
        $region25: #{tpu_custom_call.1} parent=11 // pred_check
          %p310 = pneg %p216
        $region26: #{tpu_custom_call.1} parent=11 // pred_check_branch
          %312 = sbr.rel (%p310) target = $region28
        $region27: #{tpu_custom_call.1} parent=11 // pred_region
          _
        $region28: #{tpu_custom_call.1} parent=11 // pred_fallthru
          _
        // Predicated region
        $region29: #{tpu_custom_call.1} parent=11 // pred_check
          %p313 = pneg %p237
        $region30: #{tpu_custom_call.1} parent=11 // pred_check_branch
          %315 = sbr.rel (%p313) target = $region32
        $region31: #{tpu_custom_call.1} parent=11 // pred_region
          _
        $region32: #{tpu_custom_call.1} parent=11 // pred_fallthru
          _
        // Predicated region
        $region33: #{tpu_custom_call.1} parent=11 // pred_check
          %p316 = pneg %p258
        $region34: #{tpu_custom_call.1} parent=11 // pred_check_branch
          %318 = sbr.rel (%p316) target = $region36
        $region35: #{tpu_custom_call.1} parent=11 // pred_region
          _
        $region36: #{tpu_custom_call.1} parent=11 // pred_fallthru
          _
      $region12: #{tpu_custom_call.1} parent=5 // pred_fallthru
        _
      %p319 = scmp.lt.s32.totalorder %s24, 4
      // Predicated region
      $region37: #{tpu_custom_call.1} parent=5 // pred_check
        %p320 = pneg %p319
      $region38: #{tpu_custom_call.1} parent=5 // pred_check_branch
        %322 = sbr.rel (%p320) target = $region40
      $region39: #{tpu_custom_call.1} parent=5 // pred_region
        // Predicated region
        $region41: #{tpu_custom_call.1} parent=39 // pred_check
          %p323 = pneg %p58
        $region42: #{tpu_custom_call.1} parent=39 // pred_check_branch
          %325 = sbr.rel (%p323) target = $region44
        $region43: #{tpu_custom_call.1} parent=39 // pred_region
          %s326 = sand.u32 %s48, 1
          %s327 = scalar_lea.sflag [#allocation3], %s326
          %s328 = sand.u32 %s48, 1
          %s329 = smul.addr %s328, 32
          %s330 = scalar_lea.vmem [#allocation2], %s329
          %s332 = ssub.s32 512, 512
          %333 = vsyncadd %s327, %s332
          %s334 = smul.addr %s31, 8
          %s335 = sadd.s32 %s32, %s334
          %s336 = smul.addr %s335, 128
          %s337 = scalar_lea.hbm %s0, %s336
          %s338 = sshll.u32 %s330, 4
          %s339 = int_to_ptr.vmem [resolvable:$true] %s338
          %344 = dma.hbm_to_vmem [thread:$0]  %s337, 512, %s339, %s327, 256, 128, 8
        $region44: #{tpu_custom_call.1} parent=39 // pred_fallthru
          _
        // Predicated region
        $region45: #{tpu_custom_call.1} parent=39 // pred_check
          %p345 = pneg %p92
        $region46: #{tpu_custom_call.1} parent=39 // pred_check_branch
          %347 = sbr.rel (%p345) target = $region48
        $region47: #{tpu_custom_call.1} parent=39 // pred_region
          %s348 = sand.u32 %s24, 1
          %s349 = scalar_lea.sflag [#allocation6], %s348
          %s350 = sand.u32 %s82, 1
          %s351 = smul.addr %s350, 32
          %s352 = scalar_lea.vmem [#allocation5], %s351
          %s353 = ssub.s32 %s32, 1
          %p354 = scmp.gt.s32.totalorder %s353, 0
          %s355 = scalar_select %p354, %s353, 0
          %s357 = ssub.s32 512, 512
          %358 = vsyncadd %s349, %s357
          %s359 = smul.addr %s31, 8
          %s360 = sadd.s32 %s355, %s359
          %s361 = smul.addr %s360, 128
          %s362 = scalar_lea.hbm %s1, %s361
          %s363 = sshll.u32 %s352, 4
          %s364 = int_to_ptr.vmem [resolvable:$true] %s363
          %369 = dma.hbm_to_vmem [thread:$0]  %s362, 512, %s364, %s349, 256, 128, 8
        $region48: #{tpu_custom_call.1} parent=39 // pred_fallthru
          _
        // Predicated region
        $region49: #{tpu_custom_call.1} parent=39 // pred_check
          %p370 = pneg %p126
        $region50: #{tpu_custom_call.1} parent=39 // pred_check_branch
          %372 = sbr.rel (%p370) target = $region52
        $region51: #{tpu_custom_call.1} parent=39 // pred_region
          %s373 = sand.u32 %s24, 1
          %s374 = scalar_lea.sflag [#allocation6], %s373
          %s375 = sand.u32 %s116, 1
          %s376 = smul.addr %s375, 32
          %s377 = scalar_lea.vmem [#allocation7], %s376
          %s378 = sadd.s32 %s32, 1
          %p379 = scmp.lt.s32.totalorder %s378, 1
          %s380 = scalar_select %p379, %s378, 1
          %s382 = ssub.s32 512, 512
          %383 = vsyncadd %s374, %s382
          %s384 = smul.addr %s31, 8
          %s385 = sadd.s32 %s380, %s384
          %s386 = smul.addr %s385, 128
          %s387 = scalar_lea.hbm %s2, %s386
          %s388 = sshll.u32 %s377, 4
          %s389 = int_to_ptr.vmem [resolvable:$true] %s388
          %394 = dma.hbm_to_vmem [thread:$0]  %s387, 512, %s389, %s374, 256, 128, 8
        $region52: #{tpu_custom_call.1} parent=39 // pred_fallthru
          _
      $region40: #{tpu_custom_call.1} parent=5 // pred_fallthru
        _
      %p395 = scmp.le.s32.totalorder 1, %s24
      %p396 = scmp.lt.s32.totalorder %s24, 5
      %p397 = pnand %p395, %p396
      %p398 = pneg %p397
      // Predicated region
      $region53: #{tpu_custom_call.1} parent=5 // pred_check
        _
      $region54: #{tpu_custom_call.1} parent=5 // pred_check_branch
        %400 = sbr.rel (%p397) target = $region56
      $region55: #{tpu_custom_call.1} parent=5 // pred_region
        %s401 = ssub.s32 %s24, 1
        %s402 = sand.u32 %s51, 1
        %s403 = scalar_lea.sflag [#allocation3], %s402
        %s404 = sand.u32 %s51, 1
        %s405 = smul.addr %s404, 32
        %s406 = scalar_lea.vmem [#allocation2], %s405
        // Predicated region
        $region57: #{tpu_custom_call.1} parent=55 // pred_check
          %p407 = pneg %p64
        $region58: #{tpu_custom_call.1} parent=55 // pred_check_branch
          %409 = sbr.rel (%p407) target = $region60
        $region59: #{tpu_custom_call.1} parent=55 // pred_region
          %410 = dma.done %s403, 512
        $region60: #{tpu_custom_call.1} parent=55 // pred_fallthru
          _
        %s411 = sand.u32 %s29, 1
        %s412 = scalar_lea.sflag [#allocation6], %s411
        %s413 = sand.u32 %s85, 1
        %s414 = smul.addr %s413, 32
        %s415 = scalar_lea.vmem [#allocation5], %s414
        // Predicated region
        $region61: #{tpu_custom_call.1} parent=55 // pred_check
          %p416 = pneg %p98
        $region62: #{tpu_custom_call.1} parent=55 // pred_check_branch
          %418 = sbr.rel (%p416) target = $region64
        $region63: #{tpu_custom_call.1} parent=55 // pred_region
          %419 = dma.done %s412, 512
        $region64: #{tpu_custom_call.1} parent=55 // pred_fallthru
          _
        %s420 = sand.u32 %s29, 1
        %s421 = scalar_lea.sflag [#allocation6], %s420
        %s422 = sand.u32 %s119, 1
        %s423 = smul.addr %s422, 32
        %s424 = scalar_lea.vmem [#allocation7], %s423
        // Predicated region
        $region65: #{tpu_custom_call.1} parent=55 // pred_check
          %p425 = pneg %p132
        $region66: #{tpu_custom_call.1} parent=55 // pred_check_branch
          %427 = sbr.rel (%p425) target = $region68
        $region67: #{tpu_custom_call.1} parent=55 // pred_region
          %428 = dma.done %s421, 512
        $region68: #{tpu_custom_call.1} parent=55 // pred_fallthru
          _
        %s429 = sand.u32 %s51, 1
        %s430 = scalar_lea.sflag [#allocation3], %s429
        %s431 = sand.u32 %s51, 1
        %s432 = smul.addr %s431, 32
        %s433 = scalar_lea.vmem [#allocation2], %s432
        %p434 = pneg %p64
        %p435 = pneg %p61
        %s436 = sand.u32 %s29, 1
        %s437 = scalar_lea.sflag [#allocation6], %s436
        %s438 = sand.u32 %s85, 1
        %s439 = smul.addr %s438, 32
        %s440 = scalar_lea.vmem [#allocation5], %s439
        %p441 = pneg %p98
        %p442 = pneg %p95
        %s443 = sand.u32 %s29, 1
        %s444 = scalar_lea.sflag [#allocation6], %s443
        %s445 = sand.u32 %s119, 1
        %s446 = smul.addr %s445, 32
        %s447 = scalar_lea.vmem [#allocation7], %s446
        %p448 = pneg %p132
        %p449 = pneg %p129
        %p450 = pneg %p153
        %p451 = pneg %p150
        %p452 = pneg %p174
        %p453 = pneg %p171
        %p454 = pneg %p195
        %p455 = pneg %p192
        %p456 = pneg %p216
        %p457 = pneg %p213
        %p458 = pneg %p237
        %p459 = pneg %p234
        %p460 = pneg %p258
        %p461 = pneg %p255
        %p462 = pneg %p286
        %p463 = pneg %p283
        %s464 = sand.u32 %s273, 1
        %s465 = scalar_lea.sflag [#allocation4], %s464
        %s466 = sand.u32 %s273, 1
        %s467 = smul.addr %s466, 32
        %s468 = scalar_lea.vmem [#allocation8], %s467
        %s469 = ssub.s32 %s34, 1
        %p470 = scmp.gt.s32.totalorder %s469, 0
        %s471 = scalar_select %p470, %s469, 0
        %s472 = sadd.s32 %s34, 1
        %p473 = scmp.lt.s32.totalorder %s472, 1
        %s474 = scalar_select %p473, %s472, 1
        %s476 = smul.u32 %s34, 128
        %v477 = vld [vmem:[%s406] sm:$0xff]
        %v478 = vld [vmem:[%s406 + $0x8] sm:$0xff]
        %v479 = vld [vmem:[%s406 + $0x10] sm:$0xff]
        %v480 = vld [vmem:[%s406 + $0x18] sm:$0xff]
        %v481 = vld [vmem:[%s415] sm:$0xff]
        %v482 = vld [vmem:[%s415 + $0x8] sm:$0xff]
        %v483 = vld [vmem:[%s415 + $0x10] sm:$0xff]
        %v484 = vld [vmem:[%s415 + $0x18] sm:$0xff]
        %v485 = vld [vmem:[%s424] sm:$0xff]
        %v486 = vld [vmem:[%s424 + $0x8] sm:$0xff]
        %v487 = vld [vmem:[%s424 + $0x10] sm:$0xff]
        %v488 = vld [vmem:[%s424 + $0x18] sm:$0xff]
        %v489 = vld [vmem:[%s3] sm:$0xf]
        %v490 = vld [vmem:[%s6] sm:$0xff]
        %v491 = vpack.c.bf16 %v478, %v477
        %v492 = vpack.c.bf16 %v480, %v479
        %494 = vset.pattern.permute.xlu0 0
        %495 = vperm.xlu0 %494, %v490
        %v496 = vpop.permute.xlu0 %495
        %vm498 = vcmask 261120
        %v500 = vsel %vm498, %v489, 0
        %502 = vmatprep.subr.bf16.mxu0 0
        %503 = vmatpush1.bf16.msra.mxu0 0
        %504 = vmatprep.subr.bf16.mxu0 0
        %505 = vmatpush1.bf16.msra.mxu0 0
        %506 = vmatprep.subr.bf16.mxu0 0
        %507 = vmatpush1.bf16.msra.mxu0 0
        %508 = vmatprep.subr.bf16.mxu0 0
        %509 = vmatpush1.bf16.msra.mxu0 0
        %510 = vmatprep.subr.bf16.mxu0 0
        %511 = vmatpush1.bf16.msra.mxu0 0
        %512 = vmatprep.subr.bf16.mxu0 0
        %513 = vmatpush1.bf16.msra.mxu0 0
        %514 = vmatprep.subr.bf16.mxu0 0
        %515 = vmatpush1.bf16.msra.mxu0 %v492
        %516 = vmatprep.subr.bf16.mxu0 0
        %517 = vmatpush1.bf16.msra.mxu0 %v491
        %518 = vmatprep.subr.bf16.mxu0 0
        %519 = vmatpush2.bf16.msra.mxu0 0
        %520 = vmatprep.subr.bf16.mxu0 0
        %521 = vmatpush2.bf16.msra.mxu0 0
        %522 = vmatprep.subr.bf16.mxu0 0
        %523 = vmatpush2.bf16.msra.mxu0 0
        %524 = vmatprep.subr.bf16.mxu0 0
        %525 = vmatpush2.bf16.msra.mxu0 0
        %526 = vmatprep.subr.bf16.mxu0 0
        %527 = vmatpush2.bf16.msra.mxu0 0
        %528 = vmatprep.subr.bf16.mxu0 0
        %529 = vmatpush2.bf16.msra.mxu0 0
        %530 = vmatprep.subr.bf16.mxu0 0
        %531 = vmatpush2.bf16.msra.mxu0 0
        %532 = vmatprep.subr.bf16.mxu0 0
        %533 = vmatpush2.bf16.msra.mxu0 0
        %534 = vmatprep.mubr.bf16.mxu0 0
        %535 = vmatmul.mubr.bf16.gmra.mxu0 %v500
        %v536 = vpop.f32.mrf.mxu0
        %v537 = vadd.f32 %v496, %v536
        %v538 = vpop.f32.mrf.mxu0
        %v539 = vpop.f32.mrf.mxu0
        %v540 = vpop.f32.mrf.mxu0
        %541 = vdwg.mxu0
        %v542 = vmax.f32 %v537, 0.0
        %v543 = vpack.c.bf16 %v482, %v481
        %v544 = vpack.c.bf16 %v484, %v483
        %545 = vmatprep.subr.bf16.mxu0 0
        %546 = vmatpush1.bf16.msra.mxu0 0
        %547 = vmatprep.subr.bf16.mxu0 0
        %548 = vmatpush1.bf16.msra.mxu0 0
        %549 = vmatprep.subr.bf16.mxu0 0
        %550 = vmatpush1.bf16.msra.mxu0 0
        %551 = vmatprep.subr.bf16.mxu0 0
        %552 = vmatpush1.bf16.msra.mxu0 0
        %553 = vmatprep.subr.bf16.mxu0 0
        %554 = vmatpush1.bf16.msra.mxu0 0
        %555 = vmatprep.subr.bf16.mxu0 0
        %556 = vmatpush1.bf16.msra.mxu0 0
        %557 = vmatprep.subr.bf16.mxu0 0
        %558 = vmatpush1.bf16.msra.mxu0 %v544
        %559 = vmatprep.subr.bf16.mxu0 0
        %560 = vmatpush1.bf16.msra.mxu0 %v543
        %561 = vmatprep.subr.bf16.mxu0 0
        %562 = vmatpush2.bf16.msra.mxu0 0
        %563 = vmatprep.subr.bf16.mxu0 0
        %564 = vmatpush2.bf16.msra.mxu0 0
        %565 = vmatprep.subr.bf16.mxu0 0
        %566 = vmatpush2.bf16.msra.mxu0 0
        %567 = vmatprep.subr.bf16.mxu0 0
        %568 = vmatpush2.bf16.msra.mxu0 0
        %569 = vmatprep.subr.bf16.mxu0 0
        %570 = vmatpush2.bf16.msra.mxu0 0
        %571 = vmatprep.subr.bf16.mxu0 0
        %572 = vmatpush2.bf16.msra.mxu0 0
        %573 = vmatprep.subr.bf16.mxu0 0
        %574 = vmatpush2.bf16.msra.mxu0 0
        %575 = vmatprep.subr.bf16.mxu0 0
        %576 = vmatpush2.bf16.msra.mxu0 0
        %577 = vmatprep.mubr.bf16.mxu0 0
        %578 = vmatmul.mubr.bf16.gmra.mxu0 %v500
        %v579 = vpop.f32.mrf.mxu0
        %v580 = vadd.f32 %v496, %v579
        %v581 = vpop.f32.mrf.mxu0
        %v582 = vpop.f32.mrf.mxu0
        %v583 = vpop.f32.mrf.mxu0
        %584 = vdwg.mxu0
        %v585 = vmax.f32 %v580, 0.0
        %v586 = vpack.c.bf16 %v486, %v485
        %v587 = vpack.c.bf16 %v488, %v487
        %588 = vmatprep.subr.bf16.mxu0 0
        %589 = vmatpush1.bf16.msra.mxu0 0
        %590 = vmatprep.subr.bf16.mxu0 0
        %591 = vmatpush1.bf16.msra.mxu0 0
        %592 = vmatprep.subr.bf16.mxu0 0
        %593 = vmatpush1.bf16.msra.mxu0 0
        %594 = vmatprep.subr.bf16.mxu0 0
        %595 = vmatpush1.bf16.msra.mxu0 0
        %596 = vmatprep.subr.bf16.mxu0 0
        %597 = vmatpush1.bf16.msra.mxu0 0
        %598 = vmatprep.subr.bf16.mxu0 0
        %599 = vmatpush1.bf16.msra.mxu0 0
        %600 = vmatprep.subr.bf16.mxu0 0
        %601 = vmatpush1.bf16.msra.mxu0 %v587
        %602 = vmatprep.subr.bf16.mxu0 0
        %603 = vmatpush1.bf16.msra.mxu0 %v586
        %604 = vmatprep.subr.bf16.mxu0 0
        %605 = vmatpush2.bf16.msra.mxu0 0
        %606 = vmatprep.subr.bf16.mxu0 0
        %607 = vmatpush2.bf16.msra.mxu0 0
        %608 = vmatprep.subr.bf16.mxu0 0
        %609 = vmatpush2.bf16.msra.mxu0 0
        %610 = vmatprep.subr.bf16.mxu0 0
        %611 = vmatpush2.bf16.msra.mxu0 0
        %612 = vmatprep.subr.bf16.mxu0 0
        %613 = vmatpush2.bf16.msra.mxu0 0
        %614 = vmatprep.subr.bf16.mxu0 0
        %615 = vmatpush2.bf16.msra.mxu0 0
        %616 = vmatprep.subr.bf16.mxu0 0
        %617 = vmatpush2.bf16.msra.mxu0 0
        %618 = vmatprep.subr.bf16.mxu0 0
        %619 = vmatpush2.bf16.msra.mxu0 0
        %620 = vmatprep.mubr.bf16.mxu0 0
        %621 = vmatmul.mubr.bf16.gmra.mxu0 %v500
        %v622 = vpop.f32.mrf.mxu0
        %v623 = vadd.f32 %v496, %v622
        %v624 = vpop.f32.mrf.mxu0
        %v625 = vpop.f32.mrf.mxu0
        %v626 = vpop.f32.mrf.mxu0
        %627 = vdwg.mxu0
        %v628 = vmax.f32 %v623, 0.0
        %v629 = vlaneseq
        %v630 = vand.u32 %v629, 127
        %v631 = vstv %s476
        %v632 = vadd.s32 %v630, %v631
        %s633 = ssub.s32 %s476, 128
        %v634 = vstv %s633
        %v635 = vadd.s32 %v630, %v634
        %s636 = sadd.s32 %s476, 128
        %v637 = vstv %s636
        %v638 = vadd.s32 %v630, %v637
        %vm639 = vcmp.lt.s32.totalorder %v632, 192
        %v640 = vsel %vm639, 1, 0
        %vm641 = vcmp.eq.s32.totalorder %v640, 1
        %v642 = vsel %vm641, %v542, 0.0
        %v643 = vpack.c.bf16 %v642, %v642
        %vm644 = vcmp.ge.s32.totalorder %v635, 0
        %v645 = vsel %vm644, 1, 0
        %vm646 = vcmp.eq.s32.totalorder %v645, 1
        %v647 = vsel %vm646, %v585, 0.0
        %v648 = vpack.c.bf16 %v647, %v647
        %vm649 = vcmp.lt.s32.totalorder %v638, 192
        %v650 = vsel %vm649, 1, 0
        %vm651 = vcmp.eq.s32.totalorder %v650, 1
        %v652 = vsel %vm651, %v628, 0.0
        %v653 = vpack.c.bf16 %v652, %v652
        %v656 = vrot.slane %v648, 4
        %v657 = vrot.slane %v643, 4
        %658 = vrot.lane.b32.xlu0 %v656, 127
        %v659 = vpop.permute.xlu0 %658
        %660 = vrot.lane.b32.xlu0 %v657, 127
        %v661 = vpop.permute.xlu0 %660
        %vm662 = vcmask 1039360
        %v663 = vsel %vm662, %v659, %v661
        %664 = vrot.lane.b32.xlu0 %v648, 126
        %v665 = vpop.permute.xlu0 %664
        %666 = vrot.lane.b32.xlu0 %v643, 126
        %v667 = vpop.permute.xlu0 %666
        %vm668 = vcmask 1031168
        %v669 = vsel %vm668, %v665, %v667
        %670 = vrot.lane.b32.xlu0 %v656, 125
        %v671 = vpop.permute.xlu0 %670
        %672 = vrot.lane.b32.xlu0 %v657, 125
        %v673 = vpop.permute.xlu0 %672
        %vm674 = vcmask 1022976
        %v675 = vsel %vm674, %v671, %v673
        %676 = vrot.lane.b32.xlu0 %v648, 124
        %v677 = vpop.permute.xlu0 %676
        %678 = vrot.lane.b32.xlu0 %v643, 124
        %v679 = vpop.permute.xlu0 %678
        %vm680 = vcmask 1014784
        %v681 = vsel %vm680, %v677, %v679
        %682 = vrot.lane.b32.xlu0 %v656, 123
        %v683 = vpop.permute.xlu0 %682
        %684 = vrot.lane.b32.xlu0 %v657, 123
        %v685 = vpop.permute.xlu0 %684
        %vm686 = vcmask 1006592
        %v687 = vsel %vm686, %v683, %v685
        %688 = vrot.lane.b32.xlu0 %v648, 122
        %v689 = vpop.permute.xlu0 %688
        %690 = vrot.lane.b32.xlu0 %v643, 122
        %v691 = vpop.permute.xlu0 %690
        %vm692 = vcmask 998400
        %v693 = vsel %vm692, %v689, %v691
        %694 = vrot.lane.b32.xlu0 %v656, 121
        %v695 = vpop.permute.xlu0 %694
        %696 = vrot.lane.b32.xlu0 %v657, 121
        %v697 = vpop.permute.xlu0 %696
        %vm698 = vcmask 990208
        %v699 = vsel %vm698, %v695, %v697
        %700 = vrot.lane.b32.xlu0 %v648, 120
        %v701 = vpop.permute.xlu0 %700
        %702 = vrot.lane.b32.xlu0 %v643, 120
        %v703 = vpop.permute.xlu0 %702
        %vm704 = vcmask 982016
        %v705 = vsel %vm704, %v701, %v703
        %706 = vrot.lane.b32.xlu0 %v656, 119
        %v707 = vpop.permute.xlu0 %706
        %708 = vrot.lane.b32.xlu0 %v657, 119
        %v709 = vpop.permute.xlu0 %708
        %vm710 = vcmask 973824
        %v711 = vsel %vm710, %v707, %v709
        %712 = vrot.lane.b32.xlu0 %v648, 118
        %v713 = vpop.permute.xlu0 %712
        %714 = vrot.lane.b32.xlu0 %v643, 118
        %v715 = vpop.permute.xlu0 %714
        %vm716 = vcmask 965632
        %v717 = vsel %vm716, %v713, %v715
        %718 = vrot.lane.b32.xlu0 %v656, 117
        %v719 = vpop.permute.xlu0 %718
        %720 = vrot.lane.b32.xlu0 %v657, 117
        %v721 = vpop.permute.xlu0 %720
        %vm722 = vcmask 957440
        %v723 = vsel %vm722, %v719, %v721
        %724 = vrot.lane.b32.xlu0 %v643, 116
        %v725 = vpop.permute.xlu0 %724
        %v727 = vrot.slane %v653, 4
        %728 = vrot.lane.b32.xlu0 %v657, 115
        %v729 = vpop.permute.xlu0 %728
        %730 = vrot.lane.b32.xlu0 %v727, 115
        %v731 = vpop.permute.xlu0 %730
        %vm732 = vcmask 941056
        %v733 = vsel %vm732, %v729, %v731
        %734 = vrot.lane.b32.xlu0 %v643, 114
        %v735 = vpop.permute.xlu0 %734
        %736 = vrot.lane.b32.xlu0 %v653, 114
        %v737 = vpop.permute.xlu0 %736
        %vm738 = vcmask 932864
        %v739 = vsel %vm738, %v735, %v737
        %740 = vrot.lane.b32.xlu0 %v657, 113
        %v741 = vpop.permute.xlu0 %740
        %742 = vrot.lane.b32.xlu0 %v727, 113
        %v743 = vpop.permute.xlu0 %742
        %vm744 = vcmask 924672
        %v745 = vsel %vm744, %v741, %v743
        %vm746 = vcmask 1043456
        %v749 = vsel %vm746, %v648, %v663
        %v752 = vsel %vm746, %v643, %v661
        %v755 = vsel %vm746, %v669, %v675
        %v758 = vsel %vm746, %v667, %v673
        %v761 = vsel %vm746, %v681, %v687
        %v764 = vsel %vm746, %v679, %v685
        %v767 = vsel %vm746, %v693, %v699
        %v770 = vsel %vm746, %v691, %v697
        %v773 = vsel %vm746, %v705, %v711
        %v776 = vsel %vm746, %v703, %v709
        %v779 = vsel %vm746, %v717, %v723
        %v782 = vsel %vm746, %v715, %v721
        %v785 = vsel %vm746, %v725, %v729
        %v787 = vsel %vm746, %v725, %v733
        %v790 = vsel %vm746, %v735, %v741
        %v793 = vsel %vm746, %v739, %v745
        %794 = vrot.lane.b32.xlu0 %v727, 127
        %v795 = vpop.permute.xlu0 %794
        %v796 = vsel %vm662, %v661, %v795
        %797 = vrot.lane.b32.xlu0 %v653, 126
        %v798 = vpop.permute.xlu0 %797
        %v799 = vsel %vm668, %v667, %v798
        %800 = vrot.lane.b32.xlu0 %v727, 125
        %v801 = vpop.permute.xlu0 %800
        %v802 = vsel %vm674, %v673, %v801
        %803 = vrot.lane.b32.xlu0 %v653, 124
        %v804 = vpop.permute.xlu0 %803
        %v805 = vsel %vm680, %v679, %v804
        %806 = vrot.lane.b32.xlu0 %v727, 123
        %v807 = vpop.permute.xlu0 %806
        %v808 = vsel %vm686, %v685, %v807
        %809 = vrot.lane.b32.xlu0 %v653, 122
        %v810 = vpop.permute.xlu0 %809
        %v811 = vsel %vm692, %v691, %v810
        %812 = vrot.lane.b32.xlu0 %v727, 121
        %v813 = vpop.permute.xlu0 %812
        %v814 = vsel %vm698, %v697, %v813
        %815 = vrot.lane.b32.xlu0 %v653, 120
        %v816 = vpop.permute.xlu0 %815
        %v817 = vsel %vm704, %v703, %v816
        %v819 = vsel %vm746, %v643, %v796
        %v822 = vsel %vm746, %v653, %v795
        %v825 = vsel %vm746, %v799, %v802
        %v828 = vsel %vm746, %v798, %v801
        %v831 = vsel %vm746, %v805, %v808
        %v834 = vsel %vm746, %v804, %v807
        %v837 = vsel %vm746, %v811, %v814
        %v840 = vsel %vm746, %v810, %v813
        %849 = vrot.lane.b32.xlu0 %v819, 112
        %v850 = vpop.permute.xlu0 %849
        %851 = vrot.lane.b32.xlu0 %v822, 112
        %v852 = vpop.permute.xlu0 %851
        %853 = vrot.lane.b32.xlu0 %v825, 112
        %v854 = vpop.permute.xlu0 %853
        %855 = vrot.lane.b32.xlu0 %v828, 112
        %v856 = vpop.permute.xlu0 %855
        %857 = vrot.lane.b32.xlu0 %v831, 112
        %v858 = vpop.permute.xlu0 %857
        %859 = vrot.lane.b32.xlu0 %v834, 112
        %v860 = vpop.permute.xlu0 %859
        %861 = vrot.lane.b32.xlu0 %v837, 112
        %v862 = vpop.permute.xlu0 %861
        %863 = vrot.lane.b32.xlu0 %v840, 112
        %v864 = vpop.permute.xlu0 %863
        %865 = vrot.lane.b32.xlu0 %v817, 112
        %v866 = vpop.permute.xlu0 %865
        %867 = vrot.lane.b32.xlu0 %v816, 112
        %v868 = vpop.permute.xlu0 %867
        %vm869 = vcmask 916480
        %v870 = vsel %vm869, %v850, %v852
        %v871 = vsel %vm869, %v854, %v856
        %v872 = vsel %vm869, %v858, %v860
        %v873 = vsel %vm869, %v862, %v864
        %v874 = vsel %vm869, %v866, %v868
        %v875 = vld [vmem:[%s4] sm:$0xff]
        %v876 = vld [vmem:[%s7] sm:$0xff]
        %878 = vset.pattern.permute.xlu0 0
        %879 = vperm.xlu0 %878, %v876
        %v880 = vpop.permute.xlu0 %879
        %v883 = vunpack.c.l.b16 %v875
        %v884 = vunpack.c.h.b16 %v875
        %v885 = vpack.c.b16 %v883, %v883
        %v886 = vpack.c.b16 %v884, %v884
        %904 = vrot.lane.b32.xlu0 %v749, 12
        %v905 = vpop.permute.xlu0 %904
        %906 = vrot.lane.b32.xlu0 %v752, 12
        %v907 = vpop.permute.xlu0 %906
        %908 = vrot.lane.b32.xlu0 %v755, 12
        %v909 = vpop.permute.xlu0 %908
        %910 = vrot.lane.b32.xlu0 %v758, 12
        %v911 = vpop.permute.xlu0 %910
        %912 = vrot.lane.b32.xlu0 %v761, 12
        %v913 = vpop.permute.xlu0 %912
        %914 = vrot.lane.b32.xlu0 %v764, 12
        %v915 = vpop.permute.xlu0 %914
        %916 = vrot.lane.b32.xlu0 %v767, 12
        %v917 = vpop.permute.xlu0 %916
        %918 = vrot.lane.b32.xlu0 %v770, 12
        %v919 = vpop.permute.xlu0 %918
        %920 = vrot.lane.b32.xlu0 %v773, 12
        %v921 = vpop.permute.xlu0 %920
        %922 = vrot.lane.b32.xlu0 %v776, 12
        %v923 = vpop.permute.xlu0 %922
        %924 = vrot.lane.b32.xlu0 %v779, 12
        %v925 = vpop.permute.xlu0 %924
        %926 = vrot.lane.b32.xlu0 %v782, 12
        %v927 = vpop.permute.xlu0 %926
        %928 = vrot.lane.b32.xlu0 %v785, 12
        %v929 = vpop.permute.xlu0 %928
        %930 = vrot.lane.b32.xlu0 %v787, 12
        %v931 = vpop.permute.xlu0 %930
        %932 = vrot.lane.b32.xlu0 %v790, 12
        %v933 = vpop.permute.xlu0 %932
        %934 = vrot.lane.b32.xlu0 %v793, 12
        %v935 = vpop.permute.xlu0 %934
        %936 = vrot.lane.b32.xlu0 %v850, 12
        %v937 = vpop.permute.xlu0 %936
        %938 = vrot.lane.b32.xlu0 %v870, 12
        %v939 = vpop.permute.xlu0 %938
        %940 = vrot.lane.b32.xlu0 %v854, 12
        %v941 = vpop.permute.xlu0 %940
        %942 = vrot.lane.b32.xlu0 %v871, 12
        %v943 = vpop.permute.xlu0 %942
        %944 = vrot.lane.b32.xlu0 %v858, 12
        %v945 = vpop.permute.xlu0 %944
        %946 = vrot.lane.b32.xlu0 %v872, 12
        %v947 = vpop.permute.xlu0 %946
        %948 = vrot.lane.b32.xlu0 %v862, 12
        %v949 = vpop.permute.xlu0 %948
        %950 = vrot.lane.b32.xlu0 %v873, 12
        %v951 = vpop.permute.xlu0 %950
        %952 = vrot.lane.b32.xlu0 %v866, 12
        %v953 = vpop.permute.xlu0 %952
        %954 = vrot.lane.b32.xlu0 %v874, 12
        %v955 = vpop.permute.xlu0 %954
        %vm956 = vcmask 97280
        %v957 = vsel %vm956, %v905, %v907
        %v958 = vsel %vm956, %v909, %v911
        %v959 = vsel %vm956, %v913, %v915
        %v960 = vsel %vm956, %v917, %v919
        %v961 = vsel %vm956, %v921, %v923
        %v962 = vsel %vm956, %v925, %v927
        %v963 = vsel %vm956, %v929, %v931
        %v964 = vsel %vm956, %v933, %v935
        %v965 = vsel %vm956, %v937, %v939
        %v966 = vsel %vm956, %v941, %v943
        %v967 = vsel %vm956, %v945, %v947
        %v968 = vsel %vm956, %v949, %v951
        %v969 = vsel %vm956, %v953, %v955
        %vm982 = vcmask 588800
        %v984 = vsel %vm982, %v886, 0
        %v987 = vsel %vm746, %v969, 0
        %989 = vmatprep.subr.bf16.mxu0 0
        %990 = vmatpush1.bf16.msra.mxu0 %v964
        %991 = vmatprep.subr.bf16.mxu0 0
        %992 = vmatpush1.bf16.msra.mxu0 %v963
        %993 = vmatprep.subr.bf16.mxu0 0
        %994 = vmatpush1.bf16.msra.mxu0 %v962
        %995 = vmatprep.subr.bf16.mxu0 0
        %996 = vmatpush1.bf16.msra.mxu0 %v961
        %997 = vmatprep.subr.bf16.mxu0 0
        %998 = vmatpush1.bf16.msra.mxu0 %v960
        %999 = vmatprep.subr.bf16.mxu0 0
        %1000 = vmatpush1.bf16.msra.mxu0 %v959
        %1001 = vmatprep.subr.bf16.mxu0 0
        %1002 = vmatpush1.bf16.msra.mxu0 %v958
        %1003 = vmatprep.subr.bf16.mxu0 0
        %1004 = vmatpush1.bf16.msra.mxu0 %v957
        %1005 = vmatprep.subr.bf16.mxu0 0
        %1006 = vmatpush2.bf16.msra.mxu0 0
        %1007 = vmatprep.subr.bf16.mxu0 0
        %1008 = vmatpush2.bf16.msra.mxu0 0
        %1009 = vmatprep.subr.bf16.mxu0 0
        %1010 = vmatpush2.bf16.msra.mxu0 0
        %1011 = vmatprep.subr.bf16.mxu0 0
        %1012 = vmatpush2.bf16.msra.mxu0 %v987
        %1013 = vmatprep.subr.bf16.mxu0 0
        %1014 = vmatpush2.bf16.msra.mxu0 %v968
        %1015 = vmatprep.subr.bf16.mxu0 0
        %1016 = vmatpush2.bf16.msra.mxu0 %v967
        %1017 = vmatprep.subr.bf16.mxu0 0
        %1018 = vmatpush2.bf16.msra.mxu0 %v966
        %1019 = vmatprep.subr.bf16.mxu0 0
        %1020 = vmatpush2.bf16.msra.mxu0 %v965
        %1021 = vmatprep.mubr.bf16.mxu0 %v984
        %1022 = vmatmul.mubr.bf16.gmra.mxu0 %v885
        %v1023 = vpop.f32.mrf.mxu0
        %v1024 = vadd.f32 %v880, %v1023
        %v1025 = vpop.f32.mrf.mxu0
        %v1026 = vpop.f32.mrf.mxu0
        %v1027 = vpop.f32.mrf.mxu0
        %1028 = vdwg.mxu0
        %v1029 = vmax.f32 %v1024, 0.0
        %v1030 = vpack.c.bf16 %v1029, %v1029
        %v1031 = vld [vmem:[%s5] sm:$0xf]
        %v1032 = vld [vmem:[%s5 + $0x4] sm:$0xf]
        %v1033 = vld [vmem:[%s5 + $0x8] sm:$0xf]
        %v1034 = vld [vmem:[%s5 + $0xc] sm:$0xf]
        %v1035 = vld [vmem:[%s8] sm:$0xff]
        %v1036 = vld [vmem:[%s8 + $0x8] sm:$0xff]
        %v1037 = vld [vmem:[%s8 + $0x10] sm:$0xff]
        %v1038 = vld [vmem:[%s8 + $0x18] sm:$0xff]
        %1040 = vset.pattern.permute.xlu0 0
        %1041 = vperm.xlu0 %1040, %v1035
        %v1042 = vpop.permute.xlu0 %1041
        %1045 = vset.pattern.permute.xlu0 0
        %1046 = vperm.xlu0 %1045, %v1036
        %v1047 = vpop.permute.xlu0 %1046
        %1050 = vset.pattern.permute.xlu0 0
        %1051 = vperm.xlu0 %1050, %v1037
        %v1052 = vpop.permute.xlu0 %1051
        %1055 = vset.pattern.permute.xlu0 0
        %1056 = vperm.xlu0 %1055, %v1038
        %v1057 = vpop.permute.xlu0 %1056
        %v1063 = vunpack.c.l.b16 %v1031
        %v1064 = vunpack.c.l.b16 %v1032
        %v1065 = vunpack.c.l.b16 %v1033
        %v1066 = vunpack.c.l.b16 %v1034
        %v1067 = vpack.c.b16 %v1064, %v1063
        %v1068 = vpack.c.b16 %v1066, %v1065
        %vm1069 = vcmask 64512
        %v1071 = vsel %vm1069, %v1067, 0
        %v1074 = vsel %vm1069, %v1068, 0
        %v1077 = vsel %vm746, %v1030, 0
        %1079 = vmatprep.subr.bf16.mxu0 0
        %1080 = vmatpush1.bf16.msra.mxu0 0
        %1081 = vmatprep.subr.bf16.mxu0 0
        %1082 = vmatpush1.bf16.msra.mxu0 0
        %1083 = vmatprep.subr.bf16.mxu0 0
        %1084 = vmatpush1.bf16.msra.mxu0 0
        %1085 = vmatprep.subr.bf16.mxu0 0
        %1086 = vmatpush1.bf16.msra.mxu0 0
        %1087 = vmatprep.subr.bf16.mxu0 0
        %1088 = vmatpush1.bf16.msra.mxu0 0
        %1089 = vmatprep.subr.bf16.mxu0 0
        %1090 = vmatpush1.bf16.msra.mxu0 0
        %1091 = vmatprep.subr.bf16.mxu0 0
        %1092 = vmatpush1.bf16.msra.mxu0 0
        %1093 = vmatprep.subr.bf16.mxu0 0
        %1094 = vmatpush1.bf16.msra.mxu0 %v1077
        %1095 = vmatprep.subr.bf16.mxu0 0
        %1096 = vmatpush2.bf16.msra.mxu0 0
        %1097 = vmatprep.subr.bf16.mxu0 0
        %1098 = vmatpush2.bf16.msra.mxu0 0
        %1099 = vmatprep.subr.bf16.mxu0 0
        %1100 = vmatpush2.bf16.msra.mxu0 0
        %1101 = vmatprep.subr.bf16.mxu0 0
        %1102 = vmatpush2.bf16.msra.mxu0 0
        %1103 = vmatprep.subr.bf16.mxu0 0
        %1104 = vmatpush2.bf16.msra.mxu0 0
        %1105 = vmatprep.subr.bf16.mxu0 0
        %1106 = vmatpush2.bf16.msra.mxu0 0
        %1107 = vmatprep.subr.bf16.mxu0 0
        %1108 = vmatpush2.bf16.msra.mxu0 0
        %1109 = vmatprep.subr.bf16.mxu0 0
        %1110 = vmatpush2.bf16.msra.mxu0 0
        %1111 = vmatprep.mubr.bf16.mxu0 0
        %1112 = vmatmul.mubr.bf16.gmra.mxu0 %v1071
        %v1113 = vpop.f32.mrf.mxu0
        %v1114 = vadd.f32 %v1042, %v1113
        %v1115 = vpop.f32.mrf.mxu0
        %v1116 = vpop.f32.mrf.mxu0
        %v1117 = vadd.f32 %v1047, %v1116
        %v1118 = vpop.f32.mrf.mxu0
        %1119 = vmatprep.mubr.bf16.mxu0 0
        %1120 = vmatmul.mubr.bf16.gmra.mxu0 %v1074
        %v1121 = vpop.f32.mrf.mxu0
        %v1122 = vadd.f32 %v1052, %v1121
        %v1123 = vpop.f32.mrf.mxu0
        %v1124 = vpop.f32.mrf.mxu0
        %v1125 = vadd.f32 %v1057, %v1124
        %v1126 = vpop.f32.mrf.mxu0
        %1127 = vdwg.mxu0
        %v1128 = vadd.f32 %v1114, %v477
        %v1129 = vadd.f32 %v1117, %v478
        %v1130 = vadd.f32 %v1122, %v479
        %v1131 = vadd.f32 %v1125, %v480
        %v1132 = vmax.f32 %v1128, 0.0
        %v1133 = vmax.f32 %v1129, 0.0
        %v1134 = vmax.f32 %v1130, 0.0
        %v1135 = vmax.f32 %v1131, 0.0
        %1136 = vst [vmem:[%s468] sm:$0xff] %v1132
        %1137 = vst [vmem:[%s468 + $0x8] sm:$0xff] %v1133
        %1138 = vst [vmem:[%s468 + $0x10] sm:$0xff] %v1134
        %1139 = vst [vmem:[%s468 + $0x18] sm:$0xff] %v1135
        %s1140 = sand.u32 %s273, 1
        %s1141 = scalar_lea.sflag [#allocation4], %s1140
        %s1142 = sand.u32 %s273, 1
        %s1143 = smul.addr %s1142, 32
        %s1144 = scalar_lea.vmem [#allocation8], %s1143
        // Predicated region
        $region69: #{tpu_custom_call.1} parent=55 // pred_check
          %p1145 = pneg %p283
        $region70: #{tpu_custom_call.1} parent=55 // pred_check_branch
          %1147 = sbr.rel (%p1145) target = $region72
        $region71: #{tpu_custom_call.1} parent=55 // pred_region
          %s1149 = ssub.s32 512, 512
          %1150 = vsyncadd %s1141, %s1149
          %s1151 = smul.addr %s33, 8
          %s1152 = sadd.s32 %s34, %s1151
          %s1153 = smul.addr %s1152, 128
          %s1154 = scalar_lea.hbm %s9, %s1153
          %s1155 = sshll.u32 %s1144, 4
          %s1156 = int_to_ptr.vmem [resolvable:$true] %s1155
          %1161 = dma.vmem_to_hbm [thread:$0]  %s1156, 512, %s1154, %s1141, 128, 256, 8
        $region72: #{tpu_custom_call.1} parent=55 // pred_fallthru
          _
      $region56: #{tpu_custom_call.1} parent=5 // pred_fallthru
        _
      %p1162 = scmp.le.s32.totalorder 2, %s24
      // Predicated region
      $region73: #{tpu_custom_call.1} parent=5 // pred_check
        %p1163 = pneg %p1162
      $region74: #{tpu_custom_call.1} parent=5 // pred_check_branch
        %1165 = sbr.rel (%p1163) target = $region76
      $region75: #{tpu_custom_call.1} parent=5 // pred_region
        %s1166 = ssub.s32 %s24, 2
        // Predicated region
        $region77: #{tpu_custom_call.1} parent=75 // pred_check
          %p1167 = pneg %p289
        $region78: #{tpu_custom_call.1} parent=75 // pred_check_branch
          %1169 = sbr.rel (%p1167) target = $region80
        $region79: #{tpu_custom_call.1} parent=75 // pred_region
          %s1170 = sand.u32 %s274, 1
          %s1171 = scalar_lea.sflag [#allocation4], %s1170
          %s1172 = sand.u32 %s274, 1
          %s1173 = smul.addr %s1172, 32
          %s1174 = scalar_lea.vmem [#allocation8], %s1173
          %1175 = dma.done %s1171, 512
        $region80: #{tpu_custom_call.1} parent=75 // pred_fallthru
          _
      $region76: #{tpu_custom_call.1} parent=5 // pred_fallthru
        _
    $region6: #{tpu_custom_call.1} parent=1 // loop_footer
      %s28 = sadd.s32 1, %s24
    $region7: #{tpu_custom_call.1} parent=1 // loop_footer_branch
      %23 = sbr.rel target = $region3
    $region8: #{tpu_custom_call.1} parent=1 // loop_exit
      _
    %1176 = vsyncpa [#allocation3], 1
    %s1177 = scalar_lea.sflag [#allocation3], 1
    %1178 = vsyncpa %s1177, 1
    %1179 = vsyncpa [#allocation6], 1
    %s1180 = scalar_lea.sflag [#allocation6], 1
    %1181 = vsyncpa %s1180, 1
    %1182 = vsyncpa [#allocation4], 1
    %s1183 = scalar_lea.sflag [#allocation4], 1
    %1184 = vsyncpa %s1183, 1

</llo_original>
